<compile_context>
chip_gen: v7x
topology: tpu7x:2x2x1
jax: 0.10.0
libtpu: 0.0.40
codegen_flags: <defaults>
</compile_context>

<pallas_src>
import numpy as np
import jax
import jax.numpy as jnp
from jax.experimental import pallas as pl
from jax.experimental.pallas import tpu as pltpu

IN_FEATURES = 32 * 32 * 3      # 3072
HIDDEN = 32
PADDED_HIDDEN = 128            # lane-dense hidden width
NUM_CLASSES = 10
PADDED_CLASSES = 128           # lane-dense output width
NEG_BIG = -1e30                # bias on padded logit lanes -> exp() == 0 (f32)


# ----------------------------------------------------------------------------
# Pallas kernel: fused fc1 -> relu -> fc2 -> softmax (one batch tile per step)
# ----------------------------------------------------------------------------
def fl_kernel(x_ref, w1_ref, b1_ref, w2_ref, b2_ref, o_ref):
    """x_ref : (TB, 3072) f32  (cast to bf16 in-kernel; DMA is the binder, VPU has slack)
       w1_ref: (3072, 128) bf16    b1_ref: (1, 128) f32   (cols/lanes >=32 are zero)
       w2_ref: (128, 128)  bf16    b2_ref: (1, 128) f32   (-1e30 on padded class lanes)
       o_ref : (TB, 128)   f32  softmax probs; padded class lanes are exactly 0."""
    x = x_ref[...].astype(jnp.bfloat16)
    h = jnp.dot(x, w1_ref[...], preferred_element_type=jnp.float32)
    h = jnp.maximum(h + b1_ref[...], 0.0)                       # f32 bias + ReLU
    logits = jnp.dot(h.astype(jnp.bfloat16), w2_ref[...],
                     preferred_element_type=jnp.float32) + b2_ref[...]
    m = jnp.max(logits, axis=-1, keepdims=True)
    e = jnp.exp(logits - m)                                     # padded lanes -> 0
    denom = jnp.sum(e, axis=-1, keepdims=True)
    # NOTE: approx reciprocal -> rows sum to 1 only to ~1e-3 relative error.
    o_ref[...] = e * pl.reciprocal(denom, approx=True)


# ----------------------------------------------------------------------------
# One-time weight preparation (hoisted out of the per-call path)
# ----------------------------------------------------------------------------
def prepare_params(params):
    w1 = (jnp.zeros((IN_FEATURES, PADDED_HIDDEN), jnp.float32)
          .at[:, :HIDDEN].set(params["fc1_w"].T)
          .astype(jnp.bfloat16))                                        # (3072, 128)
    b1 = (jnp.zeros((1, PADDED_HIDDEN), jnp.float32)
          .at[0, :HIDDEN].set(params["fc1_b"]))                         # (1, 128)
    w2 = (jnp.zeros((PADDED_HIDDEN, PADDED_CLASSES), jnp.float32)
          .at[:HIDDEN, :NUM_CLASSES].set(params["fc2_w"].T)
          .astype(jnp.bfloat16))                                        # (128, 128)
    b2 = (jnp.full((1, PADDED_CLASSES), NEG_BIG, jnp.float32)
          .at[0, :NUM_CLASSES].set(params["fc2_b"]))                    # (1, 128)
    return {"w1": w1, "b1": b1, "w2": w2, "b2": b2}


def _round_up(n, m):
    return (n + m - 1) // m * m


# ----------------------------------------------------------------------------
# Forward wrapper: ragged batch tiling, no activation copies outside the kernel
# ----------------------------------------------------------------------------
def fl_forward(x, prepared, *, tile_b=512):
    """x: (B, 3, 32, 32) f32 (NCHW). Returns (B, 10) softmax probabilities."""
    B = x.shape[0]
    xf = x.reshape(B, IN_FEATURES)               # == torch x.view(-1, 3072); no copy

    # Tile: <= tile_b rows, >= 8 rows, and aim for >= 2 grid steps (v7x megacore).
    tb = min(tile_b, max(8, _round_up(pl.cdiv(B, 2), 8)))
    grid = (pl.cdiv(B, tb),)                     # ragged last block is tolerated

    out = pl.pallas_call(
        fl_kernel,
        out_shape=jax.ShapeDtypeStruct((B, PADDED_CLASSES), jnp.float32),
        grid=grid,
        in_specs=[
            pl.BlockSpec((tb, IN_FEATURES), lambda i: (i, 0)),              # x tile (f32)
            pl.BlockSpec((IN_FEATURES, PADDED_HIDDEN), lambda i: (0, 0)),   # w1 (full)
            pl.BlockSpec((1, PADDED_HIDDEN), lambda i: (0, 0)),             # b1
            pl.BlockSpec((PADDED_HIDDEN, PADDED_CLASSES), lambda i: (0, 0)),# w2 (full)
            pl.BlockSpec((1, PADDED_CLASSES), lambda i: (0, 0)),            # b2
        ],
        out_specs=pl.BlockSpec((tb, PADDED_CLASSES), lambda i: (i, 0)),     # lane-dense
        compiler_params=pltpu.CompilerParams(
            dimension_semantics=("parallel",),   # batch tiles are independent
            vmem_limit_bytes=32 * 1024 * 1024,   # safe up to tile_b~1024 (f32 x tiles)
        ),
    )(xf, prepared["w1"], prepared["b1"], prepared["w2"], prepared["b2"])

    return out[:, :NUM_CLASSES]


# ----------------------------------------------------------------------------
# Deterministic parameter init (PyTorch nn.Linear default: U(+-1/sqrt(fan_in)))
# ----------------------------------------------------------------------------
def init_params(key):
    def uinit(k, shape, fan_in):
        bound = 1.0 / float(np.sqrt(fan_in))
        return jax.random.uniform(k, shape, jnp.float32, -bound, bound)

    ks = jax.random.split(key, 4)
    return {
        "fc1_w": uinit(ks[0], (HIDDEN, IN_FEATURES), IN_FEATURES),
        "fc1_b": uinit(ks[1], (HIDDEN,), IN_FEATURES),
        "fc2_w": uinit(ks[2], (NUM_CLASSES, HIDDEN), HIDDEN),
        "fc2_b": uinit(ks[3], (NUM_CLASSES,), HIDDEN),
    }


# ----------------------------------------------------------------------------
# Plain-JAX reference (mirrors the PyTorch forward; F.softmax over dim=1)
# ----------------------------------------------------------------------------
def reference_forward(x, p):
    B = x.shape[0]
    h = x.reshape(B, IN_FEATURES) @ p["fc1_w"].T + p["fc1_b"]
    h = jnp.maximum(h, 0.0)
    logits = h @ p["fc2_w"].T + p["fc2_b"]
    return jax.nn.softmax(logits, axis=-1)


if __name__ == "__main__":
    key = jax.random.PRNGKey(0)
    pkey, xkey = jax.random.split(key)
    params = init_params(pkey)
    prepared = prepare_params(params)            # one-time weight prep

    # CIFAR-10 sized input (fc1 requires 32*32*3 features); small batch=2.
    x = jax.random.normal(xkey, (2, 3, 32, 32), jnp.float32)

    out = jax.jit(fl_forward)(x, prepared)
    out = jax.block_until_ready(out)
    assert out.shape == (2, NUM_CLASSES)

    ref = reference_forward(x, params)
    np.testing.assert_allclose(np.asarray(out), np.asarray(ref), rtol=2e-2, atol=2e-2)

    print("KERNEL_OK")
</pallas_src>

<mosaic_0001>
module attributes {stable_mosaic.version = 11 : i64} {
  func.func @fl_kernel(%arg0: i32, %arg1: memref<8x3072xf32, #tpu.memory_space<vmem>>, %arg2: memref<3072x128xbf16, #tpu.memory_space<vmem>>, %arg3: memref<1x128xf32, #tpu.memory_space<vmem>>, %arg4: memref<128x128xbf16, #tpu.memory_space<vmem>>, %arg5: memref<1x128xf32, #tpu.memory_space<vmem>>, %arg6: memref<8x128xf32, #tpu.memory_space<vmem>>) attributes {dimension_semantics = [#tpu.dimension_semantics<parallel>], iteration_bounds = array<i64: 1>, scalar_prefetch = 0 : i64, scratch_operands = 0 : i64, tpu.core_type = #tpu.core_type<tc>, window_params = [{transform_indices = @transform_0, window_bounds = array<i64: 8, 3072>}, {pipeline_mode = #tpu.pipeline_mode<synchronous>, transform_indices = @transform_1, window_bounds = array<i64: 3072, 128>}, {pipeline_mode = #tpu.pipeline_mode<synchronous>, transform_indices = @transform_2, window_bounds = array<i64: 1, 128>}, {pipeline_mode = #tpu.pipeline_mode<synchronous>, transform_indices = @transform_3, window_bounds = array<i64: 128, 128>}, {pipeline_mode = #tpu.pipeline_mode<synchronous>, transform_indices = @transform_4, window_bounds = array<i64: 1, 128>}, {transform_indices = @transform_5, window_bounds = array<i64: 8, 128>}]} {
    %c0 = arith.constant 0 : index
    %c0_0 = arith.constant 0 : index
    %0 = vector.load %arg1[%c0, %c0_0] : memref<8x3072xf32, #tpu.memory_space<vmem>>, vector<8x3072xf32>
    %1 = arith.truncf %0 : vector<8x3072xf32> to vector<8x3072xbf16>
    %c0_1 = arith.constant 0 : index
    %c0_2 = arith.constant 0 : index
    %2 = vector.load %arg2[%c0_1, %c0_2] : memref<3072x128xbf16, #tpu.memory_space<vmem>>, vector<3072x128xbf16>
    %cst = arith.constant dense<0.000000e+00> : vector<8x128xf32>
    %3 = tpu.matmul %1, %2, %cst {dimension_numbers = #tpu.dot_dimension_numbers<[1], [0], [0], [1], [0, 0, 1, 1], [], []>} : vector<8x3072xbf16>, vector<3072x128xbf16>, vector<8x128xf32> -> vector<8x128xf32>
    %c0_3 = arith.constant 0 : index
    %c0_4 = arith.constant 0 : index
    %4 = vector.load %arg3[%c0_3, %c0_4] : memref<1x128xf32, #tpu.memory_space<vmem>>, vector<1x128xf32>
    %5 = vector.broadcast %4 : vector<1x128xf32> to vector<8x128xf32>
    %6 = arith.addf %3, %5 : vector<8x128xf32>
    %cst_5 = arith.constant 0.000000e+00 : f32
    %7 = vector.broadcast %cst_5 : f32 to vector<8x128xf32>
    %8 = arith.maximumf %6, %7 : vector<8x128xf32>
    %9 = arith.truncf %8 : vector<8x128xf32> to vector<8x128xbf16>
    %c0_6 = arith.constant 0 : index
    %c0_7 = arith.constant 0 : index
    %10 = vector.load %arg4[%c0_6, %c0_7] : memref<128x128xbf16, #tpu.memory_space<vmem>>, vector<128x128xbf16>
    %cst_8 = arith.constant dense<0.000000e+00> : vector<8x128xf32>
    %11 = tpu.matmul %9, %10, %cst_8 {dimension_numbers = #tpu.dot_dimension_numbers<[1], [0], [0], [1], [0, 0, 1, 1], [], []>} : vector<8x128xbf16>, vector<128x128xbf16>, vector<8x128xf32> -> vector<8x128xf32>
    %c0_9 = arith.constant 0 : index
    %c0_10 = arith.constant 0 : index
    %12 = vector.load %arg5[%c0_9, %c0_10] : memref<1x128xf32, #tpu.memory_space<vmem>>, vector<1x128xf32>
    %13 = vector.broadcast %12 : vector<1x128xf32> to vector<8x128xf32>
    %14 = arith.addf %11, %13 : vector<8x128xf32>
    %cst_11 = arith.constant dense<0xFF800000> : vector<8xf32>
    %15 = vector.multi_reduction <maximumf>, %14, %cst_11 [1] : vector<8x128xf32> to vector<8xf32>
    %16 = vector.shape_cast %15 : vector<8xf32> to vector<8x1xf32>
    %17 = vector.broadcast %16 : vector<8x1xf32> to vector<8x128xf32>
    %18 = arith.subf %14, %17 : vector<8x128xf32>
    %19 = math.exp %18 : vector<8x128xf32>
    %cst_12 = arith.constant dense<0.000000e+00> : vector<8xf32>
    %20 = vector.multi_reduction <add>, %19, %cst_12 [1] : vector<8x128xf32> to vector<8xf32>
    %21 = vector.shape_cast %20 : vector<8xf32> to vector<8x1xf32>
    %22 = tpu.reciprocal %21 {approx = true} : vector<8x1xf32> -> vector<8x1xf32>
    %23 = vector.broadcast %22 : vector<8x1xf32> to vector<8x128xf32>
    %24 = arith.mulf %19, %23 : vector<8x128xf32>
    %c0_13 = arith.constant 0 : index
    %c0_14 = arith.constant 0 : index
    %25 = vector.load %arg6[%c0_13, %c0_14] : memref<8x128xf32, #tpu.memory_space<vmem>>, vector<8x128xf32>
    tpu.vector_store %arg6[%c0_13, %c0_14], %24 {strides = array<i32>} : memref<8x128xf32, #tpu.memory_space<vmem>>, vector<8x128xf32>,
    return
  }
  func.func @transform_0(%arg0: i32) -> (i32, i32) {
    %c0_i32 = arith.constant 0 : i32
    %c0_i32_0 = arith.constant 0 : i32
    return %arg0, %c0_i32 : i32, i32
  }
  func.func @transform_1(%arg0: i32) -> (i32, i32) {
    %c0_i32 = arith.constant 0 : i32
    %c0_i32_0 = arith.constant 0 : i32
    %c0_i32_1 = arith.constant 0 : i32
    return %c0_i32, %c0_i32_0 : i32, i32
  }
  func.func @transform_2(%arg0: i32) -> (i32, i32) {
    %c0_i32 = arith.constant 0 : i32
    %c0_i32_0 = arith.constant 0 : i32
    %c0_i32_1 = arith.constant 0 : i32
    return %c0_i32, %c0_i32_0 : i32, i32
  }
  func.func @transform_3(%arg0: i32) -> (i32, i32) {
    %c0_i32 = arith.constant 0 : i32
    %c0_i32_0 = arith.constant 0 : i32
    %c0_i32_1 = arith.constant 0 : i32
    return %c0_i32, %c0_i32_0 : i32, i32
  }
  func.func @transform_4(%arg0: i32) -> (i32, i32) {
    %c0_i32 = arith.constant 0 : i32
    %c0_i32_0 = arith.constant 0 : i32
    %c0_i32_1 = arith.constant 0 : i32
    return %c0_i32, %c0_i32_0 : i32, i32
  }
  func.func @transform_5(%arg0: i32) -> (i32, i32) {
    %c0_i32 = arith.constant 0 : i32
    %c0_i32_0 = arith.constant 0 : i32
    return %arg0, %c0_i32 : i32, i32
  }
}

</mosaic_0001>

<llo_original>
// kernel: fl_forward.1
$region0: #{fl_forward.1}
  #allocation0 [shape = 'u32[]', space=smem, size = 0x4, offset = 0x4, fixed_abs, tag = 'smem constant byte address 0x4 - core index']
  #allocation1 [shape = 'u32[144,128]{1,0:T(1,128)}', space=vmem, size = 0x12000, scoped, tag = 'internal scratch']
  %s0 = inlined_call_operand.vmem [shape: f32[2,3072], index: 0, kind: input, shape index: {}]
  %s1 = inlined_call_operand.hbm [shape: bf16[3072,128], index: 1, kind: input, shape index: {}]
  %s2 = inlined_call_operand.vmem [shape: f32[1,128], index: 2, kind: input, shape index: {}]
  %s3 = inlined_call_operand.vmem [shape: bf16[128,128], index: 3, kind: input, shape index: {}]
  %s4 = inlined_call_operand.vmem [shape: f32[1,128], index: 4, kind: input, shape index: {}]
  %s5 = inlined_call_operand.hbm [shape: f32[2,128], index: 5, kind: output, shape index: {}]
  %s6 = sld [smem:[#allocation0]]
  $region34: #{fl_forward.1} parent=0
    _
  %s8 = ssub.s32 1, %s6
  %s9 = scalar_select 0, %s8, %s6
  $region1: #{fl_forward.1} parent=0
    #allocation2 [shape = 'u8[786432]{0}', space=vmem, size = 0xc0000, scoped, tag = 'input window, operand 1, single buffered']
    #allocation3 [shape = 's32[1]{0}', space=sflag, size = 0x4, scoped, tag = 'scoped memory for fl_forward.1']
    #allocation4 [shape = 's32[1]{0}', space=sflag, size = 0x4, scoped, tag = 'scoped memory for fl_forward.1']
    #allocation5 [shape = 'u8[4096]{0}', space=vmem, size = 0x1000, scoped, tag = 'output window, operand 0, single buffered']
    %10 = vsyncpa [#allocation3], 0
    %11 = vsyncpa [#allocation4], 0
    // Predicated region
    $region2: #{fl_forward.1} parent=1 // pred_check
      _
    $region3: #{fl_forward.1} parent=1 // pred_check_branch
      %13 = sbr.rel (0) target = $region5
    $region4: #{fl_forward.1} parent=1 // pred_region
      _
    $region5: #{fl_forward.1} parent=1 // pred_fallthru
      _
    // Predicated region
    $region6: #{fl_forward.1} parent=1 // pred_check
      _
    $region7: #{fl_forward.1} parent=1 // pred_check_branch
      %15 = sbr.rel (0) target = $region9
    $region8: #{fl_forward.1} parent=1 // pred_region
      %s17 = ssub.s32 24576, 24576
      %18 = vsyncadd [#allocation3], %s17
      %s19 = sshll.u32 [#allocation2], 4
      %s20 = int_to_ptr.vmem [resolvable:$true] %s19
      %25 = dma.hbm_to_vmem [thread:$0]  %s1, 24576, %s20, [#allocation3], 64, 64, 4
    $region9: #{fl_forward.1} parent=1 // pred_fallthru
      _
    // Predicated region
    $region10: #{fl_forward.1} parent=1 // pred_check
      _
    $region11: #{fl_forward.1} parent=1 // pred_check_branch
      %27 = sbr.rel (0) target = $region13
    $region12: #{fl_forward.1} parent=1 // pred_region
      _
    $region13: #{fl_forward.1} parent=1 // pred_fallthru
      _
    // Predicated region
    $region14: #{fl_forward.1} parent=1 // pred_check
      _
    $region15: #{fl_forward.1} parent=1 // pred_check_branch
      %29 = sbr.rel (0) target = $region17
    $region16: #{fl_forward.1} parent=1 // pred_region
      _
    $region17: #{fl_forward.1} parent=1 // pred_fallthru
      _
    // Predicated region
    $region18: #{fl_forward.1} parent=1 // pred_check
      _
    $region19: #{fl_forward.1} parent=1 // pred_check_branch
      %31 = sbr.rel (0) target = $region21
    $region20: #{fl_forward.1} parent=1 // pred_region
      _
    $region21: #{fl_forward.1} parent=1 // pred_fallthru
      _
    // Predicated region
    $region22: #{fl_forward.1} parent=1 // pred_check
      _
    $region23: #{fl_forward.1} parent=1 // pred_check_branch
      %33 = sbr.rel (0) target = $region25
    $region24: #{fl_forward.1} parent=1 // pred_region
      %34 = dma.done [#allocation3], 24576
    $region25: #{fl_forward.1} parent=1 // pred_fallthru
      _
    %v36 = vld [vmem:[%s0] sm:$0xff]
    %v37 = vld [vmem:[%s0 + $0x8] sm:$0xff]
    %v38 = vld [vmem:[%s0 + $0x10] sm:$0xff]
    %v39 = vld [vmem:[%s0 + $0x18] sm:$0xff]
    %v40 = vld [vmem:[%s0 + $0x20] sm:$0xff]
    %v41 = vld [vmem:[%s0 + $0x28] sm:$0xff]
    %v42 = vld [vmem:[%s0 + $0x30] sm:$0xff]
    %v43 = vld [vmem:[%s0 + $0x38] sm:$0xff]
    %v44 = vld [vmem:[%s0 + $0x40] sm:$0xff]
    %v45 = vld [vmem:[%s0 + $0x48] sm:$0xff]
    %v46 = vld [vmem:[%s0 + $0x50] sm:$0xff]
    %v47 = vld [vmem:[%s0 + $0x58] sm:$0xff]
    %v48 = vld [vmem:[%s0 + $0x60] sm:$0xff]
    %v49 = vld [vmem:[%s0 + $0x68] sm:$0xff]
    %v50 = vld [vmem:[%s0 + $0x70] sm:$0xff]
    %v51 = vld [vmem:[%s0 + $0x78] sm:$0xff]
    %v52 = vld [vmem:[%s0 + $0x80] sm:$0xff]
    %v53 = vld [vmem:[%s0 + $0x88] sm:$0xff]
    %v54 = vld [vmem:[%s0 + $0x90] sm:$0xff]
    %v55 = vld [vmem:[%s0 + $0x98] sm:$0xff]
    %v56 = vld [vmem:[%s0 + $0xa0] sm:$0xff]
    %v57 = vld [vmem:[%s0 + $0xa8] sm:$0xff]
    %v58 = vld [vmem:[%s0 + $0xb0] sm:$0xff]
    %v59 = vld [vmem:[%s0 + $0xb8] sm:$0xff]
    %v84 = vcombine.low %v36, %v42
    %v85 = vcombine.high %v36, %v42
    %v86 = vcombine.low %v48, %v54
    %v87 = vcombine.high %v48, %v54
    %v89 = vunpack.c.l.s4 1983009808
    %v90 = vunpack.c.0.s8 %v89
    %v91 = vlaneseq
    %v92 = vshrl.u32 %v91, 7
    %v93 = vsub.s32 %v90, %v92
    %v94 = vrot.slane %v84, %v93
    %v96 = vunpack.c.l.s4 1983009808
    %v97 = vunpack.c.0.s8 %v96
    %v98 = vlaneseq
    %v99 = vshrl.u32 %v98, 7
    %v100 = vsub.s32 %v97, %v99
    %v101 = vrot.slane %v85, %v100
    %v103 = vunpack.c.l.s4 1983009808
    %v104 = vunpack.c.0.s8 %v103
    %v105 = vlaneseq
    %v106 = vshrl.u32 %v105, 7
    %v107 = vsub.s32 %v104, %v106
    %v108 = vrot.slane %v86, %v107
    %v110 = vunpack.c.l.s4 1983009808
    %v111 = vunpack.c.0.s8 %v110
    %v112 = vlaneseq
    %v113 = vshrl.u32 %v112, 7
    %v114 = vsub.s32 %v111, %v113
    %v115 = vrot.slane %v87, %v114
    %v116 = vcombine.low %v94, %v108
    %v117 = vcombine.high %v94, %v108
    %v118 = vcombine.low %v101, %v115
    %v119 = vcombine.high %v101, %v115
    %v120 = vcombine.low %v37, %v43
    %v121 = vcombine.high %v37, %v43
    %v122 = vcombine.low %v49, %v55
    %v123 = vcombine.high %v49, %v55
    %v125 = vunpack.c.l.s4 1983009808
    %v126 = vunpack.c.0.s8 %v125
    %v127 = vlaneseq
    %v128 = vshrl.u32 %v127, 7
    %v129 = vsub.s32 %v126, %v128
    %v130 = vrot.slane %v120, %v129
    %v132 = vunpack.c.l.s4 1983009808
    %v133 = vunpack.c.0.s8 %v132
    %v134 = vlaneseq
    %v135 = vshrl.u32 %v134, 7
    %v136 = vsub.s32 %v133, %v135
    %v137 = vrot.slane %v121, %v136
    %v139 = vunpack.c.l.s4 1983009808
    %v140 = vunpack.c.0.s8 %v139
    %v141 = vlaneseq
    %v142 = vshrl.u32 %v141, 7
    %v143 = vsub.s32 %v140, %v142
    %v144 = vrot.slane %v122, %v143
    %v146 = vunpack.c.l.s4 1983009808
    %v147 = vunpack.c.0.s8 %v146
    %v148 = vlaneseq
    %v149 = vshrl.u32 %v148, 7
    %v150 = vsub.s32 %v147, %v149
    %v151 = vrot.slane %v123, %v150
    %v152 = vcombine.low %v130, %v144
    %v153 = vcombine.high %v130, %v144
    %v154 = vcombine.low %v137, %v151
    %v155 = vcombine.high %v137, %v151
    %v156 = vcombine.low %v38, %v44
    %v157 = vcombine.high %v38, %v44
    %v158 = vcombine.low %v50, %v56
    %v159 = vcombine.high %v50, %v56
    %v161 = vunpack.c.l.s4 1983009808
    %v162 = vunpack.c.0.s8 %v161
    %v163 = vlaneseq
    %v164 = vshrl.u32 %v163, 7
    %v165 = vsub.s32 %v162, %v164
    %v166 = vrot.slane %v156, %v165
    %v168 = vunpack.c.l.s4 1983009808
    %v169 = vunpack.c.0.s8 %v168
    %v170 = vlaneseq
    %v171 = vshrl.u32 %v170, 7
    %v172 = vsub.s32 %v169, %v171
    %v173 = vrot.slane %v157, %v172
    %v175 = vunpack.c.l.s4 1983009808
    %v176 = vunpack.c.0.s8 %v175
    %v177 = vlaneseq
    %v178 = vshrl.u32 %v177, 7
    %v179 = vsub.s32 %v176, %v178
    %v180 = vrot.slane %v158, %v179
    %v182 = vunpack.c.l.s4 1983009808
    %v183 = vunpack.c.0.s8 %v182
    %v184 = vlaneseq
    %v185 = vshrl.u32 %v184, 7
    %v186 = vsub.s32 %v183, %v185
    %v187 = vrot.slane %v159, %v186
    %v188 = vcombine.low %v166, %v180
    %v189 = vcombine.high %v166, %v180
    %v190 = vcombine.low %v173, %v187
    %v191 = vcombine.high %v173, %v187
    %v192 = vcombine.low %v39, %v45
    %v193 = vcombine.high %v39, %v45
    %v194 = vcombine.low %v51, %v57
    %v195 = vcombine.high %v51, %v57
    %v197 = vunpack.c.l.s4 1983009808
    %v198 = vunpack.c.0.s8 %v197
    %v199 = vlaneseq
    %v200 = vshrl.u32 %v199, 7
    %v201 = vsub.s32 %v198, %v200
    %v202 = vrot.slane %v192, %v201
    %v204 = vunpack.c.l.s4 1983009808
    %v205 = vunpack.c.0.s8 %v204
    %v206 = vlaneseq
    %v207 = vshrl.u32 %v206, 7
    %v208 = vsub.s32 %v205, %v207
    %v209 = vrot.slane %v193, %v208
    %v211 = vunpack.c.l.s4 1983009808
    %v212 = vunpack.c.0.s8 %v211
    %v213 = vlaneseq
    %v214 = vshrl.u32 %v213, 7
    %v215 = vsub.s32 %v212, %v214
    %v216 = vrot.slane %v194, %v215
    %v218 = vunpack.c.l.s4 1983009808
    %v219 = vunpack.c.0.s8 %v218
    %v220 = vlaneseq
    %v221 = vshrl.u32 %v220, 7
    %v222 = vsub.s32 %v219, %v221
    %v223 = vrot.slane %v195, %v222
    %v224 = vcombine.low %v202, %v216
    %v225 = vcombine.high %v202, %v216
    %v226 = vcombine.low %v209, %v223
    %v227 = vcombine.high %v209, %v223
    %v228 = vcombine.low %v40, %v46
    %v229 = vcombine.high %v40, %v46
    %v230 = vcombine.low %v52, %v58
    %v231 = vcombine.high %v52, %v58
    %v233 = vunpack.c.l.s4 1983009808
    %v234 = vunpack.c.0.s8 %v233
    %v235 = vlaneseq
    %v236 = vshrl.u32 %v235, 7
    %v237 = vsub.s32 %v234, %v236
    %v238 = vrot.slane %v228, %v237
    %v240 = vunpack.c.l.s4 1983009808
    %v241 = vunpack.c.0.s8 %v240
    %v242 = vlaneseq
    %v243 = vshrl.u32 %v242, 7
    %v244 = vsub.s32 %v241, %v243
    %v245 = vrot.slane %v229, %v244
    %v247 = vunpack.c.l.s4 1983009808
    %v248 = vunpack.c.0.s8 %v247
    %v249 = vlaneseq
    %v250 = vshrl.u32 %v249, 7
    %v251 = vsub.s32 %v248, %v250
    %v252 = vrot.slane %v230, %v251
    %v254 = vunpack.c.l.s4 1983009808
    %v255 = vunpack.c.0.s8 %v254
    %v256 = vlaneseq
    %v257 = vshrl.u32 %v256, 7
    %v258 = vsub.s32 %v255, %v257
    %v259 = vrot.slane %v231, %v258
    %v260 = vcombine.low %v238, %v252
    %v261 = vcombine.high %v238, %v252
    %v262 = vcombine.low %v245, %v259
    %v263 = vcombine.high %v245, %v259
    %v264 = vcombine.low %v41, %v47
    %v265 = vcombine.high %v41, %v47
    %v266 = vcombine.low %v53, %v59
    %v267 = vcombine.high %v53, %v59
    %v269 = vunpack.c.l.s4 1983009808
    %v270 = vunpack.c.0.s8 %v269
    %v271 = vlaneseq
    %v272 = vshrl.u32 %v271, 7
    %v273 = vsub.s32 %v270, %v272
    %v274 = vrot.slane %v264, %v273
    %v276 = vunpack.c.l.s4 1983009808
    %v277 = vunpack.c.0.s8 %v276
    %v278 = vlaneseq
    %v279 = vshrl.u32 %v278, 7
    %v280 = vsub.s32 %v277, %v279
    %v281 = vrot.slane %v265, %v280
    %v283 = vunpack.c.l.s4 1983009808
    %v284 = vunpack.c.0.s8 %v283
    %v285 = vlaneseq
    %v286 = vshrl.u32 %v285, 7
    %v287 = vsub.s32 %v284, %v286
    %v288 = vrot.slane %v266, %v287
    %v290 = vunpack.c.l.s4 1983009808
    %v291 = vunpack.c.0.s8 %v290
    %v292 = vlaneseq
    %v293 = vshrl.u32 %v292, 7
    %v294 = vsub.s32 %v291, %v293
    %v295 = vrot.slane %v267, %v294
    %v296 = vcombine.low %v274, %v288
    %v297 = vcombine.high %v274, %v288
    %v298 = vcombine.low %v281, %v295
    %v299 = vcombine.high %v281, %v295
    %v324 = vpack.c.bf16 %v116, %v116
    %v325 = vpack.c.bf16 %v117, %v117
    %v326 = vpack.c.bf16 %v118, %v118
    %v327 = vpack.c.bf16 %v119, %v119
    %v328 = vpack.c.bf16 %v152, %v152
    %v329 = vpack.c.bf16 %v153, %v153
    %v330 = vpack.c.bf16 %v154, %v154
    %v331 = vpack.c.bf16 %v155, %v155
    %v332 = vpack.c.bf16 %v188, %v188
    %v333 = vpack.c.bf16 %v189, %v189
    %v334 = vpack.c.bf16 %v190, %v190
    %v335 = vpack.c.bf16 %v191, %v191
    %v336 = vpack.c.bf16 %v224, %v224
    %v337 = vpack.c.bf16 %v225, %v225
    %v338 = vpack.c.bf16 %v226, %v226
    %v339 = vpack.c.bf16 %v227, %v227
    %v340 = vpack.c.bf16 %v260, %v260
    %v341 = vpack.c.bf16 %v261, %v261
    %v342 = vpack.c.bf16 %v262, %v262
    %v343 = vpack.c.bf16 %v263, %v263
    %v344 = vpack.c.bf16 %v296, %v296
    %v345 = vpack.c.bf16 %v297, %v297
    %v346 = vpack.c.bf16 %v298, %v298
    %v347 = vpack.c.bf16 %v299, %v299
    %v348 = vld [vmem:[#allocation2] sm:$0xf]
    %v349 = vld [vmem:[#allocation2 + $0x4] sm:$0xf]
    %v350 = vld [vmem:[#allocation2 + $0x8] sm:$0xf]
    %v351 = vld [vmem:[#allocation2 + $0xc] sm:$0xf]
    %v352 = vld [vmem:[#allocation2 + $0x10] sm:$0xf]
    %v353 = vld [vmem:[#allocation2 + $0x14] sm:$0xf]
    %v354 = vld [vmem:[#allocation2 + $0x18] sm:$0xf]
    %v355 = vld [vmem:[#allocation2 + $0x1c] sm:$0xf]
    %v356 = vld [vmem:[#allocation2 + $0x20] sm:$0xf]
    %v357 = vld [vmem:[#allocation2 + $0x24] sm:$0xf]
    %v358 = vld [vmem:[#allocation2 + $0x28] sm:$0xf]
    %v359 = vld [vmem:[#allocation2 + $0x2c] sm:$0xf]
    %v360 = vld [vmem:[#allocation2 + $0x30] sm:$0xf]
    %v361 = vld [vmem:[#allocation2 + $0x34] sm:$0xf]
    %v362 = vld [vmem:[#allocation2 + $0x38] sm:$0xf]
    %v363 = vld [vmem:[#allocation2 + $0x3c] sm:$0xf]
    %v364 = vld [vmem:[#allocation2 + $0x40] sm:$0xf]
    %v365 = vld [vmem:[#allocation2 + $0x44] sm:$0xf]
    %v366 = vld [vmem:[#allocation2 + $0x48] sm:$0xf]
    %v367 = vld [vmem:[#allocation2 + $0x4c] sm:$0xf]
    %v368 = vld [vmem:[#allocation2 + $0x50] sm:$0xf]
    %v369 = vld [vmem:[#allocation2 + $0x54] sm:$0xf]
    %v370 = vld [vmem:[#allocation2 + $0x58] sm:$0xf]
    %v371 = vld [vmem:[#allocation2 + $0x5c] sm:$0xf]
    %v372 = vld [vmem:[#allocation2 + $0x60] sm:$0xf]
    %v373 = vld [vmem:[#allocation2 + $0x64] sm:$0xf]
    %v374 = vld [vmem:[#allocation2 + $0x68] sm:$0xf]
    %v375 = vld [vmem:[#allocation2 + $0x6c] sm:$0xf]
    %v376 = vld [vmem:[#allocation2 + $0x70] sm:$0xf]
    %v377 = vld [vmem:[#allocation2 + $0x74] sm:$0xf]
    %v378 = vld [vmem:[#allocation2 + $0x78] sm:$0xf]
    %v379 = vld [vmem:[#allocation2 + $0x7c] sm:$0xf]
    %v380 = vld [vmem:[#allocation2 + $0x80] sm:$0xf]
    %v381 = vld [vmem:[#allocation2 + $0x84] sm:$0xf]
    %v382 = vld [vmem:[#allocation2 + $0x88] sm:$0xf]
    %v383 = vld [vmem:[#allocation2 + $0x8c] sm:$0xf]
    %v384 = vld [vmem:[#allocation2 + $0x90] sm:$0xf]
    %v385 = vld [vmem:[#allocation2 + $0x94] sm:$0xf]
    %v386 = vld [vmem:[#allocation2 + $0x98] sm:$0xf]
    %v387 = vld [vmem:[#allocation2 + $0x9c] sm:$0xf]
    %v388 = vld [vmem:[#allocation2 + $0xa0] sm:$0xf]
    %v389 = vld [vmem:[#allocation2 + $0xa4] sm:$0xf]
    %v390 = vld [vmem:[#allocation2 + $0xa8] sm:$0xf]
    %v391 = vld [vmem:[#allocation2 + $0xac] sm:$0xf]
    %v392 = vld [vmem:[#allocation2 + $0xb0] sm:$0xf]
    %v393 = vld [vmem:[#allocation2 + $0xb4] sm:$0xf]
    %v394 = vld [vmem:[#allocation2 + $0xb8] sm:$0xf]
    %v395 = vld [vmem:[#allocation2 + $0xbc] sm:$0xf]
    %v396 = vld [vmem:[#allocation2 + $0xc0] sm:$0xf]
    %v397 = vld [vmem:[#allocation2 + $0xc4] sm:$0xf]
    %v398 = vld [vmem:[#allocation2 + $0xc8] sm:$0xf]
    %v399 = vld [vmem:[#allocation2 + $0xcc] sm:$0xf]
    %v400 = vld [vmem:[#allocation2 + $0xd0] sm:$0xf]
    %v401 = vld [vmem:[#allocation2 + $0xd4] sm:$0xf]
    %v402 = vld [vmem:[#allocation2 + $0xd8] sm:$0xf]
    %v403 = vld [vmem:[#allocation2 + $0xdc] sm:$0xf]
    %v404 = vld [vmem:[#allocation2 + $0xe0] sm:$0xf]
    %v405 = vld [vmem:[#allocation2 + $0xe4] sm:$0xf]
    %v406 = vld [vmem:[#allocation2 + $0xe8] sm:$0xf]
    %v407 = vld [vmem:[#allocation2 + $0xec] sm:$0xf]
    %v408 = vld [vmem:[#allocation2 + $0xf0] sm:$0xf]
    %v409 = vld [vmem:[#allocation2 + $0xf4] sm:$0xf]
    %v410 = vld [vmem:[#allocation2 + $0xf8] sm:$0xf]
    %v411 = vld [vmem:[#allocation2 + $0xfc] sm:$0xf]
    %v412 = vld [vmem:[#allocation2 + $0x100] sm:$0xf]
    %v413 = vld [vmem:[#allocation2 + $0x104] sm:$0xf]
    %v414 = vld [vmem:[#allocation2 + $0x108] sm:$0xf]
    %v415 = vld [vmem:[#allocation2 + $0x10c] sm:$0xf]
    %v416 = vld [vmem:[#allocation2 + $0x110] sm:$0xf]
    %v417 = vld [vmem:[#allocation2 + $0x114] sm:$0xf]
    %v418 = vld [vmem:[#allocation2 + $0x118] sm:$0xf]
    %v419 = vld [vmem:[#allocation2 + $0x11c] sm:$0xf]
    %v420 = vld [vmem:[#allocation2 + $0x120] sm:$0xf]
    %v421 = vld [vmem:[#allocation2 + $0x124] sm:$0xf]
    %v422 = vld [vmem:[#allocation2 + $0x128] sm:$0xf]
    %v423 = vld [vmem:[#allocation2 + $0x12c] sm:$0xf]
    %v424 = vld [vmem:[#allocation2 + $0x130] sm:$0xf]
    %v425 = vld [vmem:[#allocation2 + $0x134] sm:$0xf]
    %v426 = vld [vmem:[#allocation2 + $0x138] sm:$0xf]
    %v427 = vld [vmem:[#allocation2 + $0x13c] sm:$0xf]
    %v428 = vld [vmem:[#allocation2 + $0x140] sm:$0xf]
    %v429 = vld [vmem:[#allocation2 + $0x144] sm:$0xf]
    %v430 = vld [vmem:[#allocation2 + $0x148] sm:$0xf]
    %v431 = vld [vmem:[#allocation2 + $0x14c] sm:$0xf]
    %v432 = vld [vmem:[#allocation2 + $0x150] sm:$0xf]
    %v433 = vld [vmem:[#allocation2 + $0x154] sm:$0xf]
    %v434 = vld [vmem:[#allocation2 + $0x158] sm:$0xf]
    %v435 = vld [vmem:[#allocation2 + $0x15c] sm:$0xf]
    %v436 = vld [vmem:[#allocation2 + $0x160] sm:$0xf]
    %v437 = vld [vmem:[#allocation2 + $0x164] sm:$0xf]
    %v438 = vld [vmem:[#allocation2 + $0x168] sm:$0xf]
    %v439 = vld [vmem:[#allocation2 + $0x16c] sm:$0xf]
    %v440 = vld [vmem:[#allocation2 + $0x170] sm:$0xf]
    %v441 = vld [vmem:[#allocation2 + $0x174] sm:$0xf]
    %v442 = vld [vmem:[#allocation2 + $0x178] sm:$0xf]
    %v443 = vld [vmem:[#allocation2 + $0x17c] sm:$0xf]
    %v444 = vld [vmem:[#allocation2 + $0x180] sm:$0xf]
    %v445 = vld [vmem:[#allocation2 + $0x184] sm:$0xf]
    %v446 = vld [vmem:[#allocation2 + $0x188] sm:$0xf]
    %v447 = vld [vmem:[#allocation2 + $0x18c] sm:$0xf]
    %v448 = vld [vmem:[#allocation2 + $0x190] sm:$0xf]
    %v449 = vld [vmem:[#allocation2 + $0x194] sm:$0xf]
    %v450 = vld [vmem:[#allocation2 + $0x198] sm:$0xf]
    %v451 = vld [vmem:[#allocation2 + $0x19c] sm:$0xf]
    %v452 = vld [vmem:[#allocation2 + $0x1a0] sm:$0xf]
    %v453 = vld [vmem:[#allocation2 + $0x1a4] sm:$0xf]
    %v454 = vld [vmem:[#allocation2 + $0x1a8] sm:$0xf]
    %v455 = vld [vmem:[#allocation2 + $0x1ac] sm:$0xf]
    %v456 = vld [vmem:[#allocation2 + $0x1b0] sm:$0xf]
    %v457 = vld [vmem:[#allocation2 + $0x1b4] sm:$0xf]
    %v458 = vld [vmem:[#allocation2 + $0x1b8] sm:$0xf]
    %v459 = vld [vmem:[#allocation2 + $0x1bc] sm:$0xf]
    %v460 = vld [vmem:[#allocation2 + $0x1c0] sm:$0xf]
    %v461 = vld [vmem:[#allocation2 + $0x1c4] sm:$0xf]
    %v462 = vld [vmem:[#allocation2 + $0x1c8] sm:$0xf]
    %v463 = vld [vmem:[#allocation2 + $0x1cc] sm:$0xf]
    %v464 = vld [vmem:[#allocation2 + $0x1d0] sm:$0xf]
    %v465 = vld [vmem:[#allocation2 + $0x1d4] sm:$0xf]
    %v466 = vld [vmem:[#allocation2 + $0x1d8] sm:$0xf]
    %v467 = vld [vmem:[#allocation2 + $0x1dc] sm:$0xf]
    %v468 = vld [vmem:[#allocation2 + $0x1e0] sm:$0xf]
    %v469 = vld [vmem:[#allocation2 + $0x1e4] sm:$0xf]
    %v470 = vld [vmem:[#allocation2 + $0x1e8] sm:$0xf]
    %v471 = vld [vmem:[#allocation2 + $0x1ec] sm:$0xf]
    %v472 = vld [vmem:[#allocation2 + $0x1f0] sm:$0xf]
    %v473 = vld [vmem:[#allocation2 + $0x1f4] sm:$0xf]
    %v474 = vld [vmem:[#allocation2 + $0x1f8] sm:$0xf]
    %v475 = vld [vmem:[#allocation2 + $0x1fc] sm:$0xf]
    %v476 = vld [vmem:[#allocation2 + $0x200] sm:$0xf]
    %v477 = vld [vmem:[#allocation2 + $0x204] sm:$0xf]
    %v478 = vld [vmem:[#allocation2 + $0x208] sm:$0xf]
    %v479 = vld [vmem:[#allocation2 + $0x20c] sm:$0xf]
    %v480 = vld [vmem:[#allocation2 + $0x210] sm:$0xf]
    %v481 = vld [vmem:[#allocation2 + $0x214] sm:$0xf]
    %v482 = vld [vmem:[#allocation2 + $0x218] sm:$0xf]
    %v483 = vld [vmem:[#allocation2 + $0x21c] sm:$0xf]
    %v484 = vld [vmem:[#allocation2 + $0x220] sm:$0xf]
    %v485 = vld [vmem:[#allocation2 + $0x224] sm:$0xf]
    %v486 = vld [vmem:[#allocation2 + $0x228] sm:$0xf]
    %v487 = vld [vmem:[#allocation2 + $0x22c] sm:$0xf]
    %v488 = vld [vmem:[#allocation2 + $0x230] sm:$0xf]
    %v489 = vld [vmem:[#allocation2 + $0x234] sm:$0xf]
    %v490 = vld [vmem:[#allocation2 + $0x238] sm:$0xf]
    %v491 = vld [vmem:[#allocation2 + $0x23c] sm:$0xf]
    %v492 = vld [vmem:[#allocation2 + $0x240] sm:$0xf]
    %v493 = vld [vmem:[#allocation2 + $0x244] sm:$0xf]
    %v494 = vld [vmem:[#allocation2 + $0x248] sm:$0xf]
    %v495 = vld [vmem:[#allocation2 + $0x24c] sm:$0xf]
    %v496 = vld [vmem:[#allocation2 + $0x250] sm:$0xf]
    %v497 = vld [vmem:[#allocation2 + $0x254] sm:$0xf]
    %v498 = vld [vmem:[#allocation2 + $0x258] sm:$0xf]
    %v499 = vld [vmem:[#allocation2 + $0x25c] sm:$0xf]
    %v500 = vld [vmem:[#allocation2 + $0x260] sm:$0xf]
    %v501 = vld [vmem:[#allocation2 + $0x264] sm:$0xf]
    %v502 = vld [vmem:[#allocation2 + $0x268] sm:$0xf]
    %v503 = vld [vmem:[#allocation2 + $0x26c] sm:$0xf]
    %v504 = vld [vmem:[#allocation2 + $0x270] sm:$0xf]
    %v505 = vld [vmem:[#allocation2 + $0x274] sm:$0xf]
    %v506 = vld [vmem:[#allocation2 + $0x278] sm:$0xf]
    %v507 = vld [vmem:[#allocation2 + $0x27c] sm:$0xf]
    %v508 = vld [vmem:[#allocation2 + $0x280] sm:$0xf]
    %v509 = vld [vmem:[#allocation2 + $0x284] sm:$0xf]
    %v510 = vld [vmem:[#allocation2 + $0x288] sm:$0xf]
    %v511 = vld [vmem:[#allocation2 + $0x28c] sm:$0xf]
    %v512 = vld [vmem:[#allocation2 + $0x290] sm:$0xf]
    %v513 = vld [vmem:[#allocation2 + $0x294] sm:$0xf]
    %v514 = vld [vmem:[#allocation2 + $0x298] sm:$0xf]
    %v515 = vld [vmem:[#allocation2 + $0x29c] sm:$0xf]
    %v516 = vld [vmem:[#allocation2 + $0x2a0] sm:$0xf]
    %v517 = vld [vmem:[#allocation2 + $0x2a4] sm:$0xf]
    %v518 = vld [vmem:[#allocation2 + $0x2a8] sm:$0xf]
    %v519 = vld [vmem:[#allocation2 + $0x2ac] sm:$0xf]
    %v520 = vld [vmem:[#allocation2 + $0x2b0] sm:$0xf]
    %v521 = vld [vmem:[#allocation2 + $0x2b4] sm:$0xf]
    %v522 = vld [vmem:[#allocation2 + $0x2b8] sm:$0xf]
    %v523 = vld [vmem:[#allocation2 + $0x2bc] sm:$0xf]
    %v524 = vld [vmem:[#allocation2 + $0x2c0] sm:$0xf]
    %v525 = vld [vmem:[#allocation2 + $0x2c4] sm:$0xf]
    %v526 = vld [vmem:[#allocation2 + $0x2c8] sm:$0xf]
    %v527 = vld [vmem:[#allocation2 + $0x2cc] sm:$0xf]
    %v528 = vld [vmem:[#allocation2 + $0x2d0] sm:$0xf]
    %v529 = vld [vmem:[#allocation2 + $0x2d4] sm:$0xf]
    %v530 = vld [vmem:[#allocation2 + $0x2d8] sm:$0xf]
    %v531 = vld [vmem:[#allocation2 + $0x2dc] sm:$0xf]
    %v532 = vld [vmem:[#allocation2 + $0x2e0] sm:$0xf]
    %v533 = vld [vmem:[#allocation2 + $0x2e4] sm:$0xf]
    %v534 = vld [vmem:[#allocation2 + $0x2e8] sm:$0xf]
    %v535 = vld [vmem:[#allocation2 + $0x2ec] sm:$0xf]
    %v536 = vld [vmem:[#allocation2 + $0x2f0] sm:$0xf]
    %v537 = vld [vmem:[#allocation2 + $0x2f4] sm:$0xf]
    %v538 = vld [vmem:[#allocation2 + $0x2f8] sm:$0xf]
    %v539 = vld [vmem:[#allocation2 + $0x2fc] sm:$0xf]
    %v540 = vld [vmem:[#allocation2 + $0x300] sm:$0xf]
    %v541 = vld [vmem:[#allocation2 + $0x304] sm:$0xf]
    %v542 = vld [vmem:[#allocation2 + $0x308] sm:$0xf]
    %v543 = vld [vmem:[#allocation2 + $0x30c] sm:$0xf]
    %v544 = vld [vmem:[#allocation2 + $0x310] sm:$0xf]
    %v545 = vld [vmem:[#allocation2 + $0x314] sm:$0xf]
    %v546 = vld [vmem:[#allocation2 + $0x318] sm:$0xf]
    %v547 = vld [vmem:[#allocation2 + $0x31c] sm:$0xf]
    %v548 = vld [vmem:[#allocation2 + $0x320] sm:$0xf]
    %v549 = vld [vmem:[#allocation2 + $0x324] sm:$0xf]
    %v550 = vld [vmem:[#allocation2 + $0x328] sm:$0xf]
    %v551 = vld [vmem:[#allocation2 + $0x32c] sm:$0xf]
    %v552 = vld [vmem:[#allocation2 + $0x330] sm:$0xf]
    %v553 = vld [vmem:[#allocation2 + $0x334] sm:$0xf]
    %v554 = vld [vmem:[#allocation2 + $0x338] sm:$0xf]
    %v555 = vld [vmem:[#allocation2 + $0x33c] sm:$0xf]
    %v556 = vld [vmem:[#allocation2 + $0x340] sm:$0xf]
    %v557 = vld [vmem:[#allocation2 + $0x344] sm:$0xf]
    %v558 = vld [vmem:[#allocation2 + $0x348] sm:$0xf]
    %v559 = vld [vmem:[#allocation2 + $0x34c] sm:$0xf]
    %v560 = vld [vmem:[#allocation2 + $0x350] sm:$0xf]
    %v561 = vld [vmem:[#allocation2 + $0x354] sm:$0xf]
    %v562 = vld [vmem:[#allocation2 + $0x358] sm:$0xf]
    %v563 = vld [vmem:[#allocation2 + $0x35c] sm:$0xf]
    %v564 = vld [vmem:[#allocation2 + $0x360] sm:$0xf]
    %v565 = vld [vmem:[#allocation2 + $0x364] sm:$0xf]
    %v566 = vld [vmem:[#allocation2 + $0x368] sm:$0xf]
    %v567 = vld [vmem:[#allocation2 + $0x36c] sm:$0xf]
    %v568 = vld [vmem:[#allocation2 + $0x370] sm:$0xf]
    %v569 = vld [vmem:[#allocation2 + $0x374] sm:$0xf]
    %v570 = vld [vmem:[#allocation2 + $0x378] sm:$0xf]
    %v571 = vld [vmem:[#allocation2 + $0x37c] sm:$0xf]
    %v572 = vld [vmem:[#allocation2 + $0x380] sm:$0xf]
    %v573 = vld [vmem:[#allocation2 + $0x384] sm:$0xf]
    %v574 = vld [vmem:[#allocation2 + $0x388] sm:$0xf]
    %v575 = vld [vmem:[#allocation2 + $0x38c] sm:$0xf]
    %v576 = vld [vmem:[#allocation2 + $0x390] sm:$0xf]
    %v577 = vld [vmem:[#allocation2 + $0x394] sm:$0xf]
    %v578 = vld [vmem:[#allocation2 + $0x398] sm:$0xf]
    %v579 = vld [vmem:[#allocation2 + $0x39c] sm:$0xf]
    %v580 = vld [vmem:[#allocation2 + $0x3a0] sm:$0xf]
    %v581 = vld [vmem:[#allocation2 + $0x3a4] sm:$0xf]
    %v582 = vld [vmem:[#allocation2 + $0x3a8] sm:$0xf]
    %v583 = vld [vmem:[#allocation2 + $0x3ac] sm:$0xf]
    %v584 = vld [vmem:[#allocation2 + $0x3b0] sm:$0xf]
    %v585 = vld [vmem:[#allocation2 + $0x3b4] sm:$0xf]
    %v586 = vld [vmem:[#allocation2 + $0x3b8] sm:$0xf]
    %v587 = vld [vmem:[#allocation2 + $0x3bc] sm:$0xf]
    %v588 = vld [vmem:[#allocation2 + $0x3c0] sm:$0xf]
    %v589 = vld [vmem:[#allocation2 + $0x3c4] sm:$0xf]
    %v590 = vld [vmem:[#allocation2 + $0x3c8] sm:$0xf]
    %v591 = vld [vmem:[#allocation2 + $0x3cc] sm:$0xf]
    %v592 = vld [vmem:[#allocation2 + $0x3d0] sm:$0xf]
    %v593 = vld [vmem:[#allocation2 + $0x3d4] sm:$0xf]
    %v594 = vld [vmem:[#allocation2 + $0x3d8] sm:$0xf]
    %v595 = vld [vmem:[#allocation2 + $0x3dc] sm:$0xf]
    %v596 = vld [vmem:[#allocation2 + $0x3e0] sm:$0xf]
    %v597 = vld [vmem:[#allocation2 + $0x3e4] sm:$0xf]
    %v598 = vld [vmem:[#allocation2 + $0x3e8] sm:$0xf]
    %v599 = vld [vmem:[#allocation2 + $0x3ec] sm:$0xf]
    %v600 = vld [vmem:[#allocation2 + $0x3f0] sm:$0xf]
    %v601 = vld [vmem:[#allocation2 + $0x3f4] sm:$0xf]
    %v602 = vld [vmem:[#allocation2 + $0x3f8] sm:$0xf]
    %v603 = vld [vmem:[#allocation2 + $0x3fc] sm:$0xf]
    %v604 = vld [vmem:[#allocation2 + $0x400] sm:$0xf]
    %v605 = vld [vmem:[#allocation2 + $0x404] sm:$0xf]
    %v606 = vld [vmem:[#allocation2 + $0x408] sm:$0xf]
    %v607 = vld [vmem:[#allocation2 + $0x40c] sm:$0xf]
    %v608 = vld [vmem:[#allocation2 + $0x410] sm:$0xf]
    %v609 = vld [vmem:[#allocation2 + $0x414] sm:$0xf]
    %v610 = vld [vmem:[#allocation2 + $0x418] sm:$0xf]
    %v611 = vld [vmem:[#allocation2 + $0x41c] sm:$0xf]
    %v612 = vld [vmem:[#allocation2 + $0x420] sm:$0xf]
    %v613 = vld [vmem:[#allocation2 + $0x424] sm:$0xf]
    %v614 = vld [vmem:[#allocation2 + $0x428] sm:$0xf]
    %v615 = vld [vmem:[#allocation2 + $0x42c] sm:$0xf]
    %v616 = vld [vmem:[#allocation2 + $0x430] sm:$0xf]
    %v617 = vld [vmem:[#allocation2 + $0x434] sm:$0xf]
    %v618 = vld [vmem:[#allocation2 + $0x438] sm:$0xf]
    %v619 = vld [vmem:[#allocation2 + $0x43c] sm:$0xf]
    %v620 = vld [vmem:[#allocation2 + $0x440] sm:$0xf]
    %v621 = vld [vmem:[#allocation2 + $0x444] sm:$0xf]
    %v622 = vld [vmem:[#allocation2 + $0x448] sm:$0xf]
    %v623 = vld [vmem:[#allocation2 + $0x44c] sm:$0xf]
    %v624 = vld [vmem:[#allocation2 + $0x450] sm:$0xf]
    %v625 = vld [vmem:[#allocation2 + $0x454] sm:$0xf]
    %v626 = vld [vmem:[#allocation2 + $0x458] sm:$0xf]
    %v627 = vld [vmem:[#allocation2 + $0x45c] sm:$0xf]
    %v628 = vld [vmem:[#allocation2 + $0x460] sm:$0xf]
    %v629 = vld [vmem:[#allocation2 + $0x464] sm:$0xf]
    %v630 = vld [vmem:[#allocation2 + $0x468] sm:$0xf]
    %v631 = vld [vmem:[#allocation2 + $0x46c] sm:$0xf]
    %v632 = vld [vmem:[#allocation2 + $0x470] sm:$0xf]
    %v633 = vld [vmem:[#allocation2 + $0x474] sm:$0xf]
    %v634 = vld [vmem:[#allocation2 + $0x478] sm:$0xf]
    %v635 = vld [vmem:[#allocation2 + $0x47c] sm:$0xf]
    %v636 = vld [vmem:[#allocation2 + $0x480] sm:$0xf]
    %v637 = vld [vmem:[#allocation2 + $0x484] sm:$0xf]
    %v638 = vld [vmem:[#allocation2 + $0x488] sm:$0xf]
    %v639 = vld [vmem:[#allocation2 + $0x48c] sm:$0xf]
    %v640 = vld [vmem:[#allocation2 + $0x490] sm:$0xf]
    %v641 = vld [vmem:[#allocation2 + $0x494] sm:$0xf]
    %v642 = vld [vmem:[#allocation2 + $0x498] sm:$0xf]
    %v643 = vld [vmem:[#allocation2 + $0x49c] sm:$0xf]
    %v644 = vld [vmem:[#allocation2 + $0x4a0] sm:$0xf]
    %v645 = vld [vmem:[#allocation2 + $0x4a4] sm:$0xf]
    %v646 = vld [vmem:[#allocation2 + $0x4a8] sm:$0xf]
    %v647 = vld [vmem:[#allocation2 + $0x4ac] sm:$0xf]
    %v648 = vld [vmem:[#allocation2 + $0x4b0] sm:$0xf]
    %v649 = vld [vmem:[#allocation2 + $0x4b4] sm:$0xf]
    %v650 = vld [vmem:[#allocation2 + $0x4b8] sm:$0xf]
    %v651 = vld [vmem:[#allocation2 + $0x4bc] sm:$0xf]
    %v652 = vld [vmem:[#allocation2 + $0x4c0] sm:$0xf]
    %v653 = vld [vmem:[#allocation2 + $0x4c4] sm:$0xf]
    %v654 = vld [vmem:[#allocation2 + $0x4c8] sm:$0xf]
    %v655 = vld [vmem:[#allocation2 + $0x4cc] sm:$0xf]
    %v656 = vld [vmem:[#allocation2 + $0x4d0] sm:$0xf]
    %v657 = vld [vmem:[#allocation2 + $0x4d4] sm:$0xf]
    %v658 = vld [vmem:[#allocation2 + $0x4d8] sm:$0xf]
    %v659 = vld [vmem:[#allocation2 + $0x4dc] sm:$0xf]
    %v660 = vld [vmem:[#allocation2 + $0x4e0] sm:$0xf]
    %v661 = vld [vmem:[#allocation2 + $0x4e4] sm:$0xf]
    %v662 = vld [vmem:[#allocation2 + $0x4e8] sm:$0xf]
    %v663 = vld [vmem:[#allocation2 + $0x4ec] sm:$0xf]
    %v664 = vld [vmem:[#allocation2 + $0x4f0] sm:$0xf]
    %v665 = vld [vmem:[#allocation2 + $0x4f4] sm:$0xf]
    %v666 = vld [vmem:[#allocation2 + $0x4f8] sm:$0xf]
    %v667 = vld [vmem:[#allocation2 + $0x4fc] sm:$0xf]
    %v668 = vld [vmem:[#allocation2 + $0x500] sm:$0xf]
    %v669 = vld [vmem:[#allocation2 + $0x504] sm:$0xf]
    %v670 = vld [vmem:[#allocation2 + $0x508] sm:$0xf]
    %v671 = vld [vmem:[#allocation2 + $0x50c] sm:$0xf]
    %v672 = vld [vmem:[#allocation2 + $0x510] sm:$0xf]
    %v673 = vld [vmem:[#allocation2 + $0x514] sm:$0xf]
    %v674 = vld [vmem:[#allocation2 + $0x518] sm:$0xf]
    %v675 = vld [vmem:[#allocation2 + $0x51c] sm:$0xf]
    %v676 = vld [vmem:[#allocation2 + $0x520] sm:$0xf]
    %v677 = vld [vmem:[#allocation2 + $0x524] sm:$0xf]
    %v678 = vld [vmem:[#allocation2 + $0x528] sm:$0xf]
    %v679 = vld [vmem:[#allocation2 + $0x52c] sm:$0xf]
    %v680 = vld [vmem:[#allocation2 + $0x530] sm:$0xf]
    %v681 = vld [vmem:[#allocation2 + $0x534] sm:$0xf]
    %v682 = vld [vmem:[#allocation2 + $0x538] sm:$0xf]
    %v683 = vld [vmem:[#allocation2 + $0x53c] sm:$0xf]
    %v684 = vld [vmem:[#allocation2 + $0x540] sm:$0xf]
    %v685 = vld [vmem:[#allocation2 + $0x544] sm:$0xf]
    %v686 = vld [vmem:[#allocation2 + $0x548] sm:$0xf]
    %v687 = vld [vmem:[#allocation2 + $0x54c] sm:$0xf]
    %v688 = vld [vmem:[#allocation2 + $0x550] sm:$0xf]
    %v689 = vld [vmem:[#allocation2 + $0x554] sm:$0xf]
    %v690 = vld [vmem:[#allocation2 + $0x558] sm:$0xf]
    %v691 = vld [vmem:[#allocation2 + $0x55c] sm:$0xf]
    %v692 = vld [vmem:[#allocation2 + $0x560] sm:$0xf]
    %v693 = vld [vmem:[#allocation2 + $0x564] sm:$0xf]
    %v694 = vld [vmem:[#allocation2 + $0x568] sm:$0xf]
    %v695 = vld [vmem:[#allocation2 + $0x56c] sm:$0xf]
    %v696 = vld [vmem:[#allocation2 + $0x570] sm:$0xf]
    %v697 = vld [vmem:[#allocation2 + $0x574] sm:$0xf]
    %v698 = vld [vmem:[#allocation2 + $0x578] sm:$0xf]
    %v699 = vld [vmem:[#allocation2 + $0x57c] sm:$0xf]
    %v700 = vld [vmem:[#allocation2 + $0x580] sm:$0xf]
    %v701 = vld [vmem:[#allocation2 + $0x584] sm:$0xf]
    %v702 = vld [vmem:[#allocation2 + $0x588] sm:$0xf]
    %v703 = vld [vmem:[#allocation2 + $0x58c] sm:$0xf]
    %v704 = vld [vmem:[#allocation2 + $0x590] sm:$0xf]
    %v705 = vld [vmem:[#allocation2 + $0x594] sm:$0xf]
    %v706 = vld [vmem:[#allocation2 + $0x598] sm:$0xf]
    %v707 = vld [vmem:[#allocation2 + $0x59c] sm:$0xf]
    %v708 = vld [vmem:[#allocation2 + $0x5a0] sm:$0xf]
    %v709 = vld [vmem:[#allocation2 + $0x5a4] sm:$0xf]
    %v710 = vld [vmem:[#allocation2 + $0x5a8] sm:$0xf]
    %v711 = vld [vmem:[#allocation2 + $0x5ac] sm:$0xf]
    %v712 = vld [vmem:[#allocation2 + $0x5b0] sm:$0xf]
    %v713 = vld [vmem:[#allocation2 + $0x5b4] sm:$0xf]
    %v714 = vld [vmem:[#allocation2 + $0x5b8] sm:$0xf]
    %v715 = vld [vmem:[#allocation2 + $0x5bc] sm:$0xf]
    %v716 = vld [vmem:[#allocation2 + $0x5c0] sm:$0xf]
    %v717 = vld [vmem:[#allocation2 + $0x5c4] sm:$0xf]
    %v718 = vld [vmem:[#allocation2 + $0x5c8] sm:$0xf]
    %v719 = vld [vmem:[#allocation2 + $0x5cc] sm:$0xf]
    %v720 = vld [vmem:[#allocation2 + $0x5d0] sm:$0xf]
    %v721 = vld [vmem:[#allocation2 + $0x5d4] sm:$0xf]
    %v722 = vld [vmem:[#allocation2 + $0x5d8] sm:$0xf]
    %v723 = vld [vmem:[#allocation2 + $0x5dc] sm:$0xf]
    %v724 = vld [vmem:[#allocation2 + $0x5e0] sm:$0xf]
    %v725 = vld [vmem:[#allocation2 + $0x5e4] sm:$0xf]
    %v726 = vld [vmem:[#allocation2 + $0x5e8] sm:$0xf]
    %v727 = vld [vmem:[#allocation2 + $0x5ec] sm:$0xf]
    %v728 = vld [vmem:[#allocation2 + $0x5f0] sm:$0xf]
    %v729 = vld [vmem:[#allocation2 + $0x5f4] sm:$0xf]
    %v730 = vld [vmem:[#allocation2 + $0x5f8] sm:$0xf]
    %v731 = vld [vmem:[#allocation2 + $0x5fc] sm:$0xf]
    %v732 = vld [vmem:[%s2] sm:$0x1]
    %v734 = vlaneseq
    %v735 = vshrl.u32 %v734, 7
    %v736 = vsub.s32 0, %v735
    %v737 = vrot.slane %v732, %v736
    %v1123 = vunpack.c.l.b16 %v348
    %v1124 = vunpack.c.l.b16 %v349
    %v1125 = vunpack.c.l.b16 %v350
    %v1126 = vunpack.c.l.b16 %v351
    %v1127 = vunpack.c.l.b16 %v352
    %v1128 = vunpack.c.l.b16 %v353
    %v1129 = vunpack.c.l.b16 %v354
    %v1130 = vunpack.c.l.b16 %v355
    %v1131 = vunpack.c.l.b16 %v356
    %v1132 = vunpack.c.l.b16 %v357
    %v1133 = vunpack.c.l.b16 %v358
    %v1134 = vunpack.c.l.b16 %v359
    %v1135 = vunpack.c.l.b16 %v360
    %v1136 = vunpack.c.l.b16 %v361
    %v1137 = vunpack.c.l.b16 %v362
    %v1138 = vunpack.c.l.b16 %v363
    %v1139 = vunpack.c.l.b16 %v364
    %v1140 = vunpack.c.l.b16 %v365
    %v1141 = vunpack.c.l.b16 %v366
    %v1142 = vunpack.c.l.b16 %v367
    %v1143 = vunpack.c.l.b16 %v368
    %v1144 = vunpack.c.l.b16 %v369
    %v1145 = vunpack.c.l.b16 %v370
    %v1146 = vunpack.c.l.b16 %v371
    %v1147 = vunpack.c.l.b16 %v372
    %v1148 = vunpack.c.l.b16 %v373
    %v1149 = vunpack.c.l.b16 %v374
    %v1150 = vunpack.c.l.b16 %v375
    %v1151 = vunpack.c.l.b16 %v376
    %v1152 = vunpack.c.l.b16 %v377
    %v1153 = vunpack.c.l.b16 %v378
    %v1154 = vunpack.c.l.b16 %v379
    %v1155 = vunpack.c.l.b16 %v380
    %v1156 = vunpack.c.l.b16 %v381
    %v1157 = vunpack.c.l.b16 %v382
    %v1158 = vunpack.c.l.b16 %v383
    %v1159 = vunpack.c.l.b16 %v384
    %v1160 = vunpack.c.l.b16 %v385
    %v1161 = vunpack.c.l.b16 %v386
    %v1162 = vunpack.c.l.b16 %v387
    %v1163 = vunpack.c.l.b16 %v388
    %v1164 = vunpack.c.l.b16 %v389
    %v1165 = vunpack.c.l.b16 %v390
    %v1166 = vunpack.c.l.b16 %v391
    %v1167 = vunpack.c.l.b16 %v392
    %v1168 = vunpack.c.l.b16 %v393
    %v1169 = vunpack.c.l.b16 %v394
    %v1170 = vunpack.c.l.b16 %v395
    %v1171 = vunpack.c.l.b16 %v396
    %v1172 = vunpack.c.l.b16 %v397
    %v1173 = vunpack.c.l.b16 %v398
    %v1174 = vunpack.c.l.b16 %v399
    %v1175 = vunpack.c.l.b16 %v400
    %v1176 = vunpack.c.l.b16 %v401
    %v1177 = vunpack.c.l.b16 %v402
    %v1178 = vunpack.c.l.b16 %v403
    %v1179 = vunpack.c.l.b16 %v404
    %v1180 = vunpack.c.l.b16 %v405
    %v1181 = vunpack.c.l.b16 %v406
    %v1182 = vunpack.c.l.b16 %v407
    %v1183 = vunpack.c.l.b16 %v408
    %v1184 = vunpack.c.l.b16 %v409
    %v1185 = vunpack.c.l.b16 %v410
    %v1186 = vunpack.c.l.b16 %v411
    %v1187 = vunpack.c.l.b16 %v412
    %v1188 = vunpack.c.l.b16 %v413
    %v1189 = vunpack.c.l.b16 %v414
    %v1190 = vunpack.c.l.b16 %v415
    %v1191 = vunpack.c.l.b16 %v416
    %v1192 = vunpack.c.l.b16 %v417
    %v1193 = vunpack.c.l.b16 %v418
    %v1194 = vunpack.c.l.b16 %v419
    %v1195 = vunpack.c.l.b16 %v420
    %v1196 = vunpack.c.l.b16 %v421
    %v1197 = vunpack.c.l.b16 %v422
    %v1198 = vunpack.c.l.b16 %v423
    %v1199 = vunpack.c.l.b16 %v424
    %v1200 = vunpack.c.l.b16 %v425
    %v1201 = vunpack.c.l.b16 %v426
    %v1202 = vunpack.c.l.b16 %v427
    %v1203 = vunpack.c.l.b16 %v428
    %v1204 = vunpack.c.l.b16 %v429
    %v1205 = vunpack.c.l.b16 %v430
    %v1206 = vunpack.c.l.b16 %v431
    %v1207 = vunpack.c.l.b16 %v432
    %v1208 = vunpack.c.l.b16 %v433
    %v1209 = vunpack.c.l.b16 %v434
    %v1210 = vunpack.c.l.b16 %v435
    %v1211 = vunpack.c.l.b16 %v436
    %v1212 = vunpack.c.l.b16 %v437
    %v1213 = vunpack.c.l.b16 %v438
    %v1214 = vunpack.c.l.b16 %v439
    %v1215 = vunpack.c.l.b16 %v440
    %v1216 = vunpack.c.l.b16 %v441
    %v1217 = vunpack.c.l.b16 %v442
    %v1218 = vunpack.c.l.b16 %v443
    %v1219 = vunpack.c.l.b16 %v444
    %v1220 = vunpack.c.l.b16 %v445
    %v1221 = vunpack.c.l.b16 %v446
    %v1222 = vunpack.c.l.b16 %v447
    %v1223 = vunpack.c.l.b16 %v448
    %v1224 = vunpack.c.l.b16 %v449
    %v1225 = vunpack.c.l.b16 %v450
    %v1226 = vunpack.c.l.b16 %v451
    %v1227 = vunpack.c.l.b16 %v452
    %v1228 = vunpack.c.l.b16 %v453
    %v1229 = vunpack.c.l.b16 %v454
    %v1230 = vunpack.c.l.b16 %v455
    %v1231 = vunpack.c.l.b16 %v456
    %v1232 = vunpack.c.l.b16 %v457
    %v1233 = vunpack.c.l.b16 %v458
    %v1234 = vunpack.c.l.b16 %v459
    %v1235 = vunpack.c.l.b16 %v460
    %v1236 = vunpack.c.l.b16 %v461
    %v1237 = vunpack.c.l.b16 %v462
    %v1238 = vunpack.c.l.b16 %v463
    %v1239 = vunpack.c.l.b16 %v464
    %v1240 = vunpack.c.l.b16 %v465
    %v1241 = vunpack.c.l.b16 %v466
    %v1242 = vunpack.c.l.b16 %v467
    %v1243 = vunpack.c.l.b16 %v468
    %v1244 = vunpack.c.l.b16 %v469
    %v1245 = vunpack.c.l.b16 %v470
    %v1246 = vunpack.c.l.b16 %v471
    %v1247 = vunpack.c.l.b16 %v472
    %v1248 = vunpack.c.l.b16 %v473
    %v1249 = vunpack.c.l.b16 %v474
    %v1250 = vunpack.c.l.b16 %v475
    %v1251 = vunpack.c.l.b16 %v476
    %v1252 = vunpack.c.l.b16 %v477
    %v1253 = vunpack.c.l.b16 %v478
    %v1254 = vunpack.c.l.b16 %v479
    %v1255 = vunpack.c.l.b16 %v480
    %v1256 = vunpack.c.l.b16 %v481
    %v1257 = vunpack.c.l.b16 %v482
    %v1258 = vunpack.c.l.b16 %v483
    %v1259 = vunpack.c.l.b16 %v484
    %v1260 = vunpack.c.l.b16 %v485
    %v1261 = vunpack.c.l.b16 %v486
    %v1262 = vunpack.c.l.b16 %v487
    %v1263 = vunpack.c.l.b16 %v488
    %v1264 = vunpack.c.l.b16 %v489
    %v1265 = vunpack.c.l.b16 %v490
    %v1266 = vunpack.c.l.b16 %v491
    %v1267 = vunpack.c.l.b16 %v492
    %v1268 = vunpack.c.l.b16 %v493
    %v1269 = vunpack.c.l.b16 %v494
    %v1270 = vunpack.c.l.b16 %v495
    %v1271 = vunpack.c.l.b16 %v496
    %v1272 = vunpack.c.l.b16 %v497
    %v1273 = vunpack.c.l.b16 %v498
    %v1274 = vunpack.c.l.b16 %v499
    %v1275 = vunpack.c.l.b16 %v500
    %v1276 = vunpack.c.l.b16 %v501
    %v1277 = vunpack.c.l.b16 %v502
    %v1278 = vunpack.c.l.b16 %v503
    %v1279 = vunpack.c.l.b16 %v504
    %v1280 = vunpack.c.l.b16 %v505
    %v1281 = vunpack.c.l.b16 %v506
    %v1282 = vunpack.c.l.b16 %v507
    %v1283 = vunpack.c.l.b16 %v508
    %v1284 = vunpack.c.l.b16 %v509
    %v1285 = vunpack.c.l.b16 %v510
    %v1286 = vunpack.c.l.b16 %v511
    %v1287 = vunpack.c.l.b16 %v512
    %v1288 = vunpack.c.l.b16 %v513
    %v1289 = vunpack.c.l.b16 %v514
    %v1290 = vunpack.c.l.b16 %v515
    %v1291 = vunpack.c.l.b16 %v516
    %v1292 = vunpack.c.l.b16 %v517
    %v1293 = vunpack.c.l.b16 %v518
    %v1294 = vunpack.c.l.b16 %v519
    %v1295 = vunpack.c.l.b16 %v520
    %v1296 = vunpack.c.l.b16 %v521
    %v1297 = vunpack.c.l.b16 %v522
    %v1298 = vunpack.c.l.b16 %v523
    %v1299 = vunpack.c.l.b16 %v524
    %v1300 = vunpack.c.l.b16 %v525
    %v1301 = vunpack.c.l.b16 %v526
    %v1302 = vunpack.c.l.b16 %v527
    %v1303 = vunpack.c.l.b16 %v528
    %v1304 = vunpack.c.l.b16 %v529
    %v1305 = vunpack.c.l.b16 %v530
    %v1306 = vunpack.c.l.b16 %v531
    %v1307 = vunpack.c.l.b16 %v532
    %v1308 = vunpack.c.l.b16 %v533
    %v1309 = vunpack.c.l.b16 %v534
    %v1310 = vunpack.c.l.b16 %v535
    %v1311 = vunpack.c.l.b16 %v536
    %v1312 = vunpack.c.l.b16 %v537
    %v1313 = vunpack.c.l.b16 %v538
    %v1314 = vunpack.c.l.b16 %v539
    %v1315 = vunpack.c.l.b16 %v540
    %v1316 = vunpack.c.l.b16 %v541
    %v1317 = vunpack.c.l.b16 %v542
    %v1318 = vunpack.c.l.b16 %v543
    %v1319 = vunpack.c.l.b16 %v544
    %v1320 = vunpack.c.l.b16 %v545
    %v1321 = vunpack.c.l.b16 %v546
    %v1322 = vunpack.c.l.b16 %v547
    %v1323 = vunpack.c.l.b16 %v548
    %v1324 = vunpack.c.l.b16 %v549
    %v1325 = vunpack.c.l.b16 %v550
    %v1326 = vunpack.c.l.b16 %v551
    %v1327 = vunpack.c.l.b16 %v552
    %v1328 = vunpack.c.l.b16 %v553
    %v1329 = vunpack.c.l.b16 %v554
    %v1330 = vunpack.c.l.b16 %v555
    %v1331 = vunpack.c.l.b16 %v556
    %v1332 = vunpack.c.l.b16 %v557
    %v1333 = vunpack.c.l.b16 %v558
    %v1334 = vunpack.c.l.b16 %v559
    %v1335 = vunpack.c.l.b16 %v560
    %v1336 = vunpack.c.l.b16 %v561
    %v1337 = vunpack.c.l.b16 %v562
    %v1338 = vunpack.c.l.b16 %v563
    %v1339 = vunpack.c.l.b16 %v564
    %v1340 = vunpack.c.l.b16 %v565
    %v1341 = vunpack.c.l.b16 %v566
    %v1342 = vunpack.c.l.b16 %v567
    %v1343 = vunpack.c.l.b16 %v568
    %v1344 = vunpack.c.l.b16 %v569
    %v1345 = vunpack.c.l.b16 %v570
    %v1346 = vunpack.c.l.b16 %v571
    %v1347 = vunpack.c.l.b16 %v572
    %v1348 = vunpack.c.l.b16 %v573
    %v1349 = vunpack.c.l.b16 %v574
    %v1350 = vunpack.c.l.b16 %v575
    %v1351 = vunpack.c.l.b16 %v576
    %v1352 = vunpack.c.l.b16 %v577
    %v1353 = vunpack.c.l.b16 %v578
    %v1354 = vunpack.c.l.b16 %v579
    %v1355 = vunpack.c.l.b16 %v580
    %v1356 = vunpack.c.l.b16 %v581
    %v1357 = vunpack.c.l.b16 %v582
    %v1358 = vunpack.c.l.b16 %v583
    %v1359 = vunpack.c.l.b16 %v584
    %v1360 = vunpack.c.l.b16 %v585
    %v1361 = vunpack.c.l.b16 %v586
    %v1362 = vunpack.c.l.b16 %v587
    %v1363 = vunpack.c.l.b16 %v588
    %v1364 = vunpack.c.l.b16 %v589
    %v1365 = vunpack.c.l.b16 %v590
    %v1366 = vunpack.c.l.b16 %v591
    %v1367 = vunpack.c.l.b16 %v592
    %v1368 = vunpack.c.l.b16 %v593
    %v1369 = vunpack.c.l.b16 %v594
    %v1370 = vunpack.c.l.b16 %v595
    %v1371 = vunpack.c.l.b16 %v596
    %v1372 = vunpack.c.l.b16 %v597
    %v1373 = vunpack.c.l.b16 %v598
    %v1374 = vunpack.c.l.b16 %v599
    %v1375 = vunpack.c.l.b16 %v600
    %v1376 = vunpack.c.l.b16 %v601
    %v1377 = vunpack.c.l.b16 %v602
    %v1378 = vunpack.c.l.b16 %v603
    %v1379 = vunpack.c.l.b16 %v604
    %v1380 = vunpack.c.l.b16 %v605
    %v1381 = vunpack.c.l.b16 %v606
    %v1382 = vunpack.c.l.b16 %v607
    %v1383 = vunpack.c.l.b16 %v608
    %v1384 = vunpack.c.l.b16 %v609
    %v1385 = vunpack.c.l.b16 %v610
    %v1386 = vunpack.c.l.b16 %v611
    %v1387 = vunpack.c.l.b16 %v612
    %v1388 = vunpack.c.l.b16 %v613
    %v1389 = vunpack.c.l.b16 %v614
    %v1390 = vunpack.c.l.b16 %v615
    %v1391 = vunpack.c.l.b16 %v616
    %v1392 = vunpack.c.l.b16 %v617
    %v1393 = vunpack.c.l.b16 %v618
    %v1394 = vunpack.c.l.b16 %v619
    %v1395 = vunpack.c.l.b16 %v620
    %v1396 = vunpack.c.l.b16 %v621
    %v1397 = vunpack.c.l.b16 %v622
    %v1398 = vunpack.c.l.b16 %v623
    %v1399 = vunpack.c.l.b16 %v624
    %v1400 = vunpack.c.l.b16 %v625
    %v1401 = vunpack.c.l.b16 %v626
    %v1402 = vunpack.c.l.b16 %v627
    %v1403 = vunpack.c.l.b16 %v628
    %v1404 = vunpack.c.l.b16 %v629
    %v1405 = vunpack.c.l.b16 %v630
    %v1406 = vunpack.c.l.b16 %v631
    %v1407 = vunpack.c.l.b16 %v632
    %v1408 = vunpack.c.l.b16 %v633
    %v1409 = vunpack.c.l.b16 %v634
    %v1410 = vunpack.c.l.b16 %v635
    %v1411 = vunpack.c.l.b16 %v636
    %v1412 = vunpack.c.l.b16 %v637
    %v1413 = vunpack.c.l.b16 %v638
    %v1414 = vunpack.c.l.b16 %v639
    %v1415 = vunpack.c.l.b16 %v640
    %v1416 = vunpack.c.l.b16 %v641
    %v1417 = vunpack.c.l.b16 %v642
    %v1418 = vunpack.c.l.b16 %v643
    %v1419 = vunpack.c.l.b16 %v644
    %v1420 = vunpack.c.l.b16 %v645
    %v1421 = vunpack.c.l.b16 %v646
    %v1422 = vunpack.c.l.b16 %v647
    %v1423 = vunpack.c.l.b16 %v648
    %v1424 = vunpack.c.l.b16 %v649
    %v1425 = vunpack.c.l.b16 %v650
    %v1426 = vunpack.c.l.b16 %v651
    %v1427 = vunpack.c.l.b16 %v652
    %v1428 = vunpack.c.l.b16 %v653
    %v1429 = vunpack.c.l.b16 %v654
    %v1430 = vunpack.c.l.b16 %v655
    %v1431 = vunpack.c.l.b16 %v656
    %v1432 = vunpack.c.l.b16 %v657
    %v1433 = vunpack.c.l.b16 %v658
    %v1434 = vunpack.c.l.b16 %v659
    %v1435 = vunpack.c.l.b16 %v660
    %v1436 = vunpack.c.l.b16 %v661
    %v1437 = vunpack.c.l.b16 %v662
    %v1438 = vunpack.c.l.b16 %v663
    %v1439 = vunpack.c.l.b16 %v664
    %v1440 = vunpack.c.l.b16 %v665
    %v1441 = vunpack.c.l.b16 %v666
    %v1442 = vunpack.c.l.b16 %v667
    %v1443 = vunpack.c.l.b16 %v668
    %v1444 = vunpack.c.l.b16 %v669
    %v1445 = vunpack.c.l.b16 %v670
    %v1446 = vunpack.c.l.b16 %v671
    %v1447 = vunpack.c.l.b16 %v672
    %v1448 = vunpack.c.l.b16 %v673
    %v1449 = vunpack.c.l.b16 %v674
    %v1450 = vunpack.c.l.b16 %v675
    %v1451 = vunpack.c.l.b16 %v676
    %v1452 = vunpack.c.l.b16 %v677
    %v1453 = vunpack.c.l.b16 %v678
    %v1454 = vunpack.c.l.b16 %v679
    %v1455 = vunpack.c.l.b16 %v680
    %v1456 = vunpack.c.l.b16 %v681
    %v1457 = vunpack.c.l.b16 %v682
    %v1458 = vunpack.c.l.b16 %v683
    %v1459 = vunpack.c.l.b16 %v684
    %v1460 = vunpack.c.l.b16 %v685
    %v1461 = vunpack.c.l.b16 %v686
    %v1462 = vunpack.c.l.b16 %v687
    %v1463 = vunpack.c.l.b16 %v688
    %v1464 = vunpack.c.l.b16 %v689
    %v1465 = vunpack.c.l.b16 %v690
    %v1466 = vunpack.c.l.b16 %v691
    %v1467 = vunpack.c.l.b16 %v692
    %v1468 = vunpack.c.l.b16 %v693
    %v1469 = vunpack.c.l.b16 %v694
    %v1470 = vunpack.c.l.b16 %v695
    %v1471 = vunpack.c.l.b16 %v696
    %v1472 = vunpack.c.l.b16 %v697
    %v1473 = vunpack.c.l.b16 %v698
    %v1474 = vunpack.c.l.b16 %v699
    %v1475 = vunpack.c.l.b16 %v700
    %v1476 = vunpack.c.l.b16 %v701
    %v1477 = vunpack.c.l.b16 %v702
    %v1478 = vunpack.c.l.b16 %v703
    %v1479 = vunpack.c.l.b16 %v704
    %v1480 = vunpack.c.l.b16 %v705
    %v1481 = vunpack.c.l.b16 %v706
    %v1482 = vunpack.c.l.b16 %v707
    %v1483 = vunpack.c.l.b16 %v708
    %v1484 = vunpack.c.l.b16 %v709
    %v1485 = vunpack.c.l.b16 %v710
    %v1486 = vunpack.c.l.b16 %v711
    %v1487 = vunpack.c.l.b16 %v712
    %v1488 = vunpack.c.l.b16 %v713
    %v1489 = vunpack.c.l.b16 %v714
    %v1490 = vunpack.c.l.b16 %v715
    %v1491 = vunpack.c.l.b16 %v716
    %v1492 = vunpack.c.l.b16 %v717
    %v1493 = vunpack.c.l.b16 %v718
    %v1494 = vunpack.c.l.b16 %v719
    %v1495 = vunpack.c.l.b16 %v720
    %v1496 = vunpack.c.l.b16 %v721
    %v1497 = vunpack.c.l.b16 %v722
    %v1498 = vunpack.c.l.b16 %v723
    %v1499 = vunpack.c.l.b16 %v724
    %v1500 = vunpack.c.l.b16 %v725
    %v1501 = vunpack.c.l.b16 %v726
    %v1502 = vunpack.c.l.b16 %v727
    %v1503 = vunpack.c.l.b16 %v728
    %v1504 = vunpack.c.l.b16 %v729
    %v1505 = vunpack.c.l.b16 %v730
    %v1506 = vunpack.c.l.b16 %v731
    %v1507 = vpack.c.b16 %v1124, %v1123
    %v1508 = vpack.c.b16 %v1126, %v1125
    %v1509 = vpack.c.b16 %v1128, %v1127
    %v1510 = vpack.c.b16 %v1130, %v1129
    %v1511 = vpack.c.b16 %v1132, %v1131
    %v1512 = vpack.c.b16 %v1134, %v1133
    %v1513 = vpack.c.b16 %v1136, %v1135
    %v1514 = vpack.c.b16 %v1138, %v1137
    %v1515 = vpack.c.b16 %v1140, %v1139
    %v1516 = vpack.c.b16 %v1142, %v1141
    %v1517 = vpack.c.b16 %v1144, %v1143
    %v1518 = vpack.c.b16 %v1146, %v1145
    %v1519 = vpack.c.b16 %v1148, %v1147
    %v1520 = vpack.c.b16 %v1150, %v1149
    %v1521 = vpack.c.b16 %v1152, %v1151
    %v1522 = vpack.c.b16 %v1154, %v1153
    %v1523 = vpack.c.b16 %v1156, %v1155
    %v1524 = vpack.c.b16 %v1158, %v1157
    %v1525 = vpack.c.b16 %v1160, %v1159
    %v1526 = vpack.c.b16 %v1162, %v1161
    %v1527 = vpack.c.b16 %v1164, %v1163
    %v1528 = vpack.c.b16 %v1166, %v1165
    %v1529 = vpack.c.b16 %v1168, %v1167
    %v1530 = vpack.c.b16 %v1170, %v1169
    %v1531 = vpack.c.b16 %v1172, %v1171
    %v1532 = vpack.c.b16 %v1174, %v1173
    %v1533 = vpack.c.b16 %v1176, %v1175
    %v1534 = vpack.c.b16 %v1178, %v1177
    %v1535 = vpack.c.b16 %v1180, %v1179
    %v1536 = vpack.c.b16 %v1182, %v1181
    %v1537 = vpack.c.b16 %v1184, %v1183
    %v1538 = vpack.c.b16 %v1186, %v1185
    %v1539 = vpack.c.b16 %v1188, %v1187
    %v1540 = vpack.c.b16 %v1190, %v1189
    %v1541 = vpack.c.b16 %v1192, %v1191
    %v1542 = vpack.c.b16 %v1194, %v1193
    %v1543 = vpack.c.b16 %v1196, %v1195
    %v1544 = vpack.c.b16 %v1198, %v1197
    %v1545 = vpack.c.b16 %v1200, %v1199
    %v1546 = vpack.c.b16 %v1202, %v1201
    %v1547 = vpack.c.b16 %v1204, %v1203
    %v1548 = vpack.c.b16 %v1206, %v1205
    %v1549 = vpack.c.b16 %v1208, %v1207
    %v1550 = vpack.c.b16 %v1210, %v1209
    %v1551 = vpack.c.b16 %v1212, %v1211
    %v1552 = vpack.c.b16 %v1214, %v1213
    %v1553 = vpack.c.b16 %v1216, %v1215
    %v1554 = vpack.c.b16 %v1218, %v1217
    %v1555 = vpack.c.b16 %v1220, %v1219
    %v1556 = vpack.c.b16 %v1222, %v1221
    %v1557 = vpack.c.b16 %v1224, %v1223
    %v1558 = vpack.c.b16 %v1226, %v1225
    %v1559 = vpack.c.b16 %v1228, %v1227
    %v1560 = vpack.c.b16 %v1230, %v1229
    %v1561 = vpack.c.b16 %v1232, %v1231
    %v1562 = vpack.c.b16 %v1234, %v1233
    %v1563 = vpack.c.b16 %v1236, %v1235
    %v1564 = vpack.c.b16 %v1238, %v1237
    %v1565 = vpack.c.b16 %v1240, %v1239
    %v1566 = vpack.c.b16 %v1242, %v1241
    %v1567 = vpack.c.b16 %v1244, %v1243
    %v1568 = vpack.c.b16 %v1246, %v1245
    %v1569 = vpack.c.b16 %v1248, %v1247
    %v1570 = vpack.c.b16 %v1250, %v1249
    %v1571 = vpack.c.b16 %v1252, %v1251
    %v1572 = vpack.c.b16 %v1254, %v1253
    %v1573 = vpack.c.b16 %v1256, %v1255
    %v1574 = vpack.c.b16 %v1258, %v1257
    %v1575 = vpack.c.b16 %v1260, %v1259
    %v1576 = vpack.c.b16 %v1262, %v1261
    %v1577 = vpack.c.b16 %v1264, %v1263
    %v1578 = vpack.c.b16 %v1266, %v1265
    %v1579 = vpack.c.b16 %v1268, %v1267
    %v1580 = vpack.c.b16 %v1270, %v1269
    %v1581 = vpack.c.b16 %v1272, %v1271
    %v1582 = vpack.c.b16 %v1274, %v1273
    %v1583 = vpack.c.b16 %v1276, %v1275
    %v1584 = vpack.c.b16 %v1278, %v1277
    %v1585 = vpack.c.b16 %v1280, %v1279
    %v1586 = vpack.c.b16 %v1282, %v1281
    %v1587 = vpack.c.b16 %v1284, %v1283
    %v1588 = vpack.c.b16 %v1286, %v1285
    %v1589 = vpack.c.b16 %v1288, %v1287
    %v1590 = vpack.c.b16 %v1290, %v1289
    %v1591 = vpack.c.b16 %v1292, %v1291
    %v1592 = vpack.c.b16 %v1294, %v1293
    %v1593 = vpack.c.b16 %v1296, %v1295
    %v1594 = vpack.c.b16 %v1298, %v1297
    %v1595 = vpack.c.b16 %v1300, %v1299
    %v1596 = vpack.c.b16 %v1302, %v1301
    %v1597 = vpack.c.b16 %v1304, %v1303
    %v1598 = vpack.c.b16 %v1306, %v1305
    %v1599 = vpack.c.b16 %v1308, %v1307
    %v1600 = vpack.c.b16 %v1310, %v1309
    %v1601 = vpack.c.b16 %v1312, %v1311
    %v1602 = vpack.c.b16 %v1314, %v1313
    %v1603 = vpack.c.b16 %v1316, %v1315
    %v1604 = vpack.c.b16 %v1318, %v1317
    %v1605 = vpack.c.b16 %v1320, %v1319
    %v1606 = vpack.c.b16 %v1322, %v1321
    %v1607 = vpack.c.b16 %v1324, %v1323
    %v1608 = vpack.c.b16 %v1326, %v1325
    %v1609 = vpack.c.b16 %v1328, %v1327
    %v1610 = vpack.c.b16 %v1330, %v1329
    %v1611 = vpack.c.b16 %v1332, %v1331
    %v1612 = vpack.c.b16 %v1334, %v1333
    %v1613 = vpack.c.b16 %v1336, %v1335
    %v1614 = vpack.c.b16 %v1338, %v1337
    %v1615 = vpack.c.b16 %v1340, %v1339
    %v1616 = vpack.c.b16 %v1342, %v1341
    %v1617 = vpack.c.b16 %v1344, %v1343
    %v1618 = vpack.c.b16 %v1346, %v1345
    %v1619 = vpack.c.b16 %v1348, %v1347
    %v1620 = vpack.c.b16 %v1350, %v1349
    %v1621 = vpack.c.b16 %v1352, %v1351
    %v1622 = vpack.c.b16 %v1354, %v1353
    %v1623 = vpack.c.b16 %v1356, %v1355
    %v1624 = vpack.c.b16 %v1358, %v1357
    %v1625 = vpack.c.b16 %v1360, %v1359
    %v1626 = vpack.c.b16 %v1362, %v1361
    %v1627 = vpack.c.b16 %v1364, %v1363
    %v1628 = vpack.c.b16 %v1366, %v1365
    %v1629 = vpack.c.b16 %v1368, %v1367
    %v1630 = vpack.c.b16 %v1370, %v1369
    %v1631 = vpack.c.b16 %v1372, %v1371
    %v1632 = vpack.c.b16 %v1374, %v1373
    %v1633 = vpack.c.b16 %v1376, %v1375
    %v1634 = vpack.c.b16 %v1378, %v1377
    %v1635 = vpack.c.b16 %v1380, %v1379
    %v1636 = vpack.c.b16 %v1382, %v1381
    %v1637 = vpack.c.b16 %v1384, %v1383
    %v1638 = vpack.c.b16 %v1386, %v1385
    %v1639 = vpack.c.b16 %v1388, %v1387
    %v1640 = vpack.c.b16 %v1390, %v1389
    %v1641 = vpack.c.b16 %v1392, %v1391
    %v1642 = vpack.c.b16 %v1394, %v1393
    %v1643 = vpack.c.b16 %v1396, %v1395
    %v1644 = vpack.c.b16 %v1398, %v1397
    %v1645 = vpack.c.b16 %v1400, %v1399
    %v1646 = vpack.c.b16 %v1402, %v1401
    %v1647 = vpack.c.b16 %v1404, %v1403
    %v1648 = vpack.c.b16 %v1406, %v1405
    %v1649 = vpack.c.b16 %v1408, %v1407
    %v1650 = vpack.c.b16 %v1410, %v1409
    %v1651 = vpack.c.b16 %v1412, %v1411
    %v1652 = vpack.c.b16 %v1414, %v1413
    %v1653 = vpack.c.b16 %v1416, %v1415
    %v1654 = vpack.c.b16 %v1418, %v1417
    %v1655 = vpack.c.b16 %v1420, %v1419
    %v1656 = vpack.c.b16 %v1422, %v1421
    %v1657 = vpack.c.b16 %v1424, %v1423
    %v1658 = vpack.c.b16 %v1426, %v1425
    %v1659 = vpack.c.b16 %v1428, %v1427
    %v1660 = vpack.c.b16 %v1430, %v1429
    %v1661 = vpack.c.b16 %v1432, %v1431
    %v1662 = vpack.c.b16 %v1434, %v1433
    %v1663 = vpack.c.b16 %v1436, %v1435
    %v1664 = vpack.c.b16 %v1438, %v1437
    %v1665 = vpack.c.b16 %v1440, %v1439
    %v1666 = vpack.c.b16 %v1442, %v1441
    %v1667 = vpack.c.b16 %v1444, %v1443
    %v1668 = vpack.c.b16 %v1446, %v1445
    %v1669 = vpack.c.b16 %v1448, %v1447
    %v1670 = vpack.c.b16 %v1450, %v1449
    %v1671 = vpack.c.b16 %v1452, %v1451
    %v1672 = vpack.c.b16 %v1454, %v1453
    %v1673 = vpack.c.b16 %v1456, %v1455
    %v1674 = vpack.c.b16 %v1458, %v1457
    %v1675 = vpack.c.b16 %v1460, %v1459
    %v1676 = vpack.c.b16 %v1462, %v1461
    %v1677 = vpack.c.b16 %v1464, %v1463
    %v1678 = vpack.c.b16 %v1466, %v1465
    %v1679 = vpack.c.b16 %v1468, %v1467
    %v1680 = vpack.c.b16 %v1470, %v1469
    %v1681 = vpack.c.b16 %v1472, %v1471
    %v1682 = vpack.c.b16 %v1474, %v1473
    %v1683 = vpack.c.b16 %v1476, %v1475
    %v1684 = vpack.c.b16 %v1478, %v1477
    %v1685 = vpack.c.b16 %v1480, %v1479
    %v1686 = vpack.c.b16 %v1482, %v1481
    %v1687 = vpack.c.b16 %v1484, %v1483
    %v1688 = vpack.c.b16 %v1486, %v1485
    %v1689 = vpack.c.b16 %v1488, %v1487
    %v1690 = vpack.c.b16 %v1490, %v1489
    %v1691 = vpack.c.b16 %v1492, %v1491
    %v1692 = vpack.c.b16 %v1494, %v1493
    %v1693 = vpack.c.b16 %v1496, %v1495
    %v1694 = vpack.c.b16 %v1498, %v1497
    %v1695 = vpack.c.b16 %v1500, %v1499
    %v1696 = vpack.c.b16 %v1502, %v1501
    %v1697 = vpack.c.b16 %v1504, %v1503
    %v1698 = vpack.c.b16 %v1506, %v1505
    %1891 = vmatprep.subr.bf16.mxu0 0
    %1892 = vmatpush1.bf16.msra.mxu0 %v1507
    %1893 = vmatprep.subr.bf16.mxu0 0
    %1894 = vmatpush1.bf16.msra.mxu0 %v1508
    %1895 = vmatprep.subr.bf16.mxu0 0
    %1896 = vmatpush1.bf16.msra.mxu0 %v1509
    %1897 = vmatprep.subr.bf16.mxu0 0
    %1898 = vmatpush1.bf16.msra.mxu0 %v1510
    %1899 = vmatprep.subr.bf16.mxu0 0
    %1900 = vmatpush1.bf16.msra.mxu0 %v1511
    %1901 = vmatprep.subr.bf16.mxu0 0
    %1902 = vmatpush1.bf16.msra.mxu0 %v1512
    %1903 = vmatprep.subr.bf16.mxu0 0
    %1904 = vmatpush1.bf16.msra.mxu0 %v1513
    %1905 = vmatprep.subr.bf16.mxu0 0
    %1906 = vmatpush1.bf16.msra.mxu0 %v1514
    %1907 = vmatprep.subr.bf16.mxu0 0
    %1908 = vmatpush1.bf16.msra.mxu0 %v1515
    %1909 = vmatprep.subr.bf16.mxu0 0
    %1910 = vmatpush1.bf16.msra.mxu0 %v1516
    %1911 = vmatprep.subr.bf16.mxu0 0
    %1912 = vmatpush1.bf16.msra.mxu0 %v1517
    %1913 = vmatprep.subr.bf16.mxu0 0
    %1914 = vmatpush1.bf16.msra.mxu0 %v1518
    %1915 = vmatprep.subr.bf16.mxu0 0
    %1916 = vmatpush1.bf16.msra.mxu0 %v1519
    %1917 = vmatprep.subr.bf16.mxu0 0
    %1918 = vmatpush1.bf16.msra.mxu0 %v1520
    %1919 = vmatprep.subr.bf16.mxu0 0
    %1920 = vmatpush1.bf16.msra.mxu0 %v1521
    %1921 = vmatprep.subr.bf16.mxu0 0
    %1922 = vmatpush1.bf16.msra.mxu0 %v1522
    %1923 = vmatprep.mubr.bf16.mxu0 %v325
    %1924 = vmatmul.mubr.bf16.gmra.mrb[0].mxu0 %v324
    %v1925 = vpop.f32.mrb[0].mxu0
    %v1926 = vadd.f32 %v737, %v1925
    %v1927 = vpop.f32.mrb[0].mxu0
    %v1928 = vpop.f32.mrb[0].mxu0
    %v1929 = vpop.f32.mrb[0].mxu0
    %1930 = vdwg.mxu0
    %1931 = vmatprep.subr.bf16.mxu0 0
    %1932 = vmatpush1.bf16.msra.mxu0 %v1523
    %1933 = vmatprep.subr.bf16.mxu0 0
    %1934 = vmatpush1.bf16.msra.mxu0 %v1524
    %1935 = vmatprep.subr.bf16.mxu0 0
    %1936 = vmatpush1.bf16.msra.mxu0 %v1525
    %1937 = vmatprep.subr.bf16.mxu0 0
    %1938 = vmatpush1.bf16.msra.mxu0 %v1526
    %1939 = vmatprep.subr.bf16.mxu0 0
    %1940 = vmatpush1.bf16.msra.mxu0 %v1527
    %1941 = vmatprep.subr.bf16.mxu0 0
    %1942 = vmatpush1.bf16.msra.mxu0 %v1528
    %1943 = vmatprep.subr.bf16.mxu0 0
    %1944 = vmatpush1.bf16.msra.mxu0 %v1529
    %1945 = vmatprep.subr.bf16.mxu0 0
    %1946 = vmatpush1.bf16.msra.mxu0 %v1530
    %1947 = vmatprep.subr.bf16.mxu0 0
    %1948 = vmatpush1.bf16.msra.mxu0 %v1531
    %1949 = vmatprep.subr.bf16.mxu0 0
    %1950 = vmatpush1.bf16.msra.mxu0 %v1532
    %1951 = vmatprep.subr.bf16.mxu0 0
    %1952 = vmatpush1.bf16.msra.mxu0 %v1533
    %1953 = vmatprep.subr.bf16.mxu0 0
    %1954 = vmatpush1.bf16.msra.mxu0 %v1534
    %1955 = vmatprep.subr.bf16.mxu0 0
    %1956 = vmatpush1.bf16.msra.mxu0 %v1535
    %1957 = vmatprep.subr.bf16.mxu0 0
    %1958 = vmatpush1.bf16.msra.mxu0 %v1536
    %1959 = vmatprep.subr.bf16.mxu0 0
    %1960 = vmatpush1.bf16.msra.mxu0 %v1537
    %1961 = vmatprep.subr.bf16.mxu0 0
    %1962 = vmatpush1.bf16.msra.mxu0 %v1538
    %1963 = vmatprep.mubr.bf16.mxu0 %v327
    %1964 = vmatmul.mubr.bf16.gmra.mrb[0].mxu0 %v326
    %v1965 = vpop.f32.mrb[0].mxu0
    %v1966 = vadd.f32 %v1926, %v1965
    %v1967 = vpop.f32.mrb[0].mxu0
    %v1968 = vpop.f32.mrb[0].mxu0
    %v1969 = vpop.f32.mrb[0].mxu0
    %1970 = vdwg.mxu0
    %1971 = vmatprep.subr.bf16.mxu0 0
    %1972 = vmatpush1.bf16.msra.mxu0 %v1539
    %1973 = vmatprep.subr.bf16.mxu0 0
    %1974 = vmatpush1.bf16.msra.mxu0 %v1540
    %1975 = vmatprep.subr.bf16.mxu0 0
    %1976 = vmatpush1.bf16.msra.mxu0 %v1541
    %1977 = vmatprep.subr.bf16.mxu0 0
    %1978 = vmatpush1.bf16.msra.mxu0 %v1542
    %1979 = vmatprep.subr.bf16.mxu0 0
    %1980 = vmatpush1.bf16.msra.mxu0 %v1543
    %1981 = vmatprep.subr.bf16.mxu0 0
    %1982 = vmatpush1.bf16.msra.mxu0 %v1544
    %1983 = vmatprep.subr.bf16.mxu0 0
    %1984 = vmatpush1.bf16.msra.mxu0 %v1545
    %1985 = vmatprep.subr.bf16.mxu0 0
    %1986 = vmatpush1.bf16.msra.mxu0 %v1546
    %1987 = vmatprep.subr.bf16.mxu0 0
    %1988 = vmatpush1.bf16.msra.mxu0 %v1547
    %1989 = vmatprep.subr.bf16.mxu0 0
    %1990 = vmatpush1.bf16.msra.mxu0 %v1548
    %1991 = vmatprep.subr.bf16.mxu0 0
    %1992 = vmatpush1.bf16.msra.mxu0 %v1549
    %1993 = vmatprep.subr.bf16.mxu0 0
    %1994 = vmatpush1.bf16.msra.mxu0 %v1550
    %1995 = vmatprep.subr.bf16.mxu0 0
    %1996 = vmatpush1.bf16.msra.mxu0 %v1551
    %1997 = vmatprep.subr.bf16.mxu0 0
    %1998 = vmatpush1.bf16.msra.mxu0 %v1552
    %1999 = vmatprep.subr.bf16.mxu0 0
    %2000 = vmatpush1.bf16.msra.mxu0 %v1553
    %2001 = vmatprep.subr.bf16.mxu0 0
    %2002 = vmatpush1.bf16.msra.mxu0 %v1554
    %2003 = vmatprep.mubr.bf16.mxu0 %v329
    %2004 = vmatmul.mubr.bf16.gmra.mrb[0].mxu0 %v328
    %v2005 = vpop.f32.mrb[0].mxu0
    %v2006 = vadd.f32 %v1966, %v2005
    %v2007 = vpop.f32.mrb[0].mxu0
    %v2008 = vpop.f32.mrb[0].mxu0
    %v2009 = vpop.f32.mrb[0].mxu0
    %2010 = vdwg.mxu0
    %2011 = vmatprep.subr.bf16.mxu0 0
    %2012 = vmatpush1.bf16.msra.mxu0 %v1555
    %2013 = vmatprep.subr.bf16.mxu0 0
    %2014 = vmatpush1.bf16.msra.mxu0 %v1556
    %2015 = vmatprep.subr.bf16.mxu0 0
    %2016 = vmatpush1.bf16.msra.mxu0 %v1557
    %2017 = vmatprep.subr.bf16.mxu0 0
    %2018 = vmatpush1.bf16.msra.mxu0 %v1558
    %2019 = vmatprep.subr.bf16.mxu0 0
    %2020 = vmatpush1.bf16.msra.mxu0 %v1559
    %2021 = vmatprep.subr.bf16.mxu0 0
    %2022 = vmatpush1.bf16.msra.mxu0 %v1560
    %2023 = vmatprep.subr.bf16.mxu0 0
    %2024 = vmatpush1.bf16.msra.mxu0 %v1561
    %2025 = vmatprep.subr.bf16.mxu0 0
    %2026 = vmatpush1.bf16.msra.mxu0 %v1562
    %2027 = vmatprep.subr.bf16.mxu0 0
    %2028 = vmatpush1.bf16.msra.mxu0 %v1563
    %2029 = vmatprep.subr.bf16.mxu0 0
    %2030 = vmatpush1.bf16.msra.mxu0 %v1564
    %2031 = vmatprep.subr.bf16.mxu0 0
    %2032 = vmatpush1.bf16.msra.mxu0 %v1565
    %2033 = vmatprep.subr.bf16.mxu0 0
    %2034 = vmatpush1.bf16.msra.mxu0 %v1566
    %2035 = vmatprep.subr.bf16.mxu0 0
    %2036 = vmatpush1.bf16.msra.mxu0 %v1567
    %2037 = vmatprep.subr.bf16.mxu0 0
    %2038 = vmatpush1.bf16.msra.mxu0 %v1568
    %2039 = vmatprep.subr.bf16.mxu0 0
    %2040 = vmatpush1.bf16.msra.mxu0 %v1569
    %2041 = vmatprep.subr.bf16.mxu0 0
    %2042 = vmatpush1.bf16.msra.mxu0 %v1570
    %2043 = vmatprep.mubr.bf16.mxu0 %v331
    %2044 = vmatmul.mubr.bf16.gmra.mrb[0].mxu0 %v330
    %v2045 = vpop.f32.mrb[0].mxu0
    %v2046 = vadd.f32 %v2006, %v2045
    %v2047 = vpop.f32.mrb[0].mxu0
    %v2048 = vpop.f32.mrb[0].mxu0
    %v2049 = vpop.f32.mrb[0].mxu0
    %2050 = vdwg.mxu0
    %2051 = vmatprep.subr.bf16.mxu0 0
    %2052 = vmatpush1.bf16.msra.mxu0 %v1571
    %2053 = vmatprep.subr.bf16.mxu0 0
    %2054 = vmatpush1.bf16.msra.mxu0 %v1572
    %2055 = vmatprep.subr.bf16.mxu0 0
    %2056 = vmatpush1.bf16.msra.mxu0 %v1573
    %2057 = vmatprep.subr.bf16.mxu0 0
    %2058 = vmatpush1.bf16.msra.mxu0 %v1574
    %2059 = vmatprep.subr.bf16.mxu0 0
    %2060 = vmatpush1.bf16.msra.mxu0 %v1575
    %2061 = vmatprep.subr.bf16.mxu0 0
    %2062 = vmatpush1.bf16.msra.mxu0 %v1576
    %2063 = vmatprep.subr.bf16.mxu0 0
    %2064 = vmatpush1.bf16.msra.mxu0 %v1577
    %2065 = vmatprep.subr.bf16.mxu0 0
    %2066 = vmatpush1.bf16.msra.mxu0 %v1578
    %2067 = vmatprep.subr.bf16.mxu0 0
    %2068 = vmatpush1.bf16.msra.mxu0 %v1579
    %2069 = vmatprep.subr.bf16.mxu0 0
    %2070 = vmatpush1.bf16.msra.mxu0 %v1580
    %2071 = vmatprep.subr.bf16.mxu0 0
    %2072 = vmatpush1.bf16.msra.mxu0 %v1581
    %2073 = vmatprep.subr.bf16.mxu0 0
    %2074 = vmatpush1.bf16.msra.mxu0 %v1582
    %2075 = vmatprep.subr.bf16.mxu0 0
    %2076 = vmatpush1.bf16.msra.mxu0 %v1583
    %2077 = vmatprep.subr.bf16.mxu0 0
    %2078 = vmatpush1.bf16.msra.mxu0 %v1584
    %2079 = vmatprep.subr.bf16.mxu0 0
    %2080 = vmatpush1.bf16.msra.mxu0 %v1585
    %2081 = vmatprep.subr.bf16.mxu0 0
    %2082 = vmatpush1.bf16.msra.mxu0 %v1586
    %2083 = vmatprep.mubr.bf16.mxu0 %v333
    %2084 = vmatmul.mubr.bf16.gmra.mrb[0].mxu0 %v332
    %v2085 = vpop.f32.mrb[0].mxu0
    %v2086 = vadd.f32 %v2046, %v2085
    %v2087 = vpop.f32.mrb[0].mxu0
    %v2088 = vpop.f32.mrb[0].mxu0
    %v2089 = vpop.f32.mrb[0].mxu0
    %2090 = vdwg.mxu0
    %2091 = vmatprep.subr.bf16.mxu0 0
    %2092 = vmatpush1.bf16.msra.mxu0 %v1587
    %2093 = vmatprep.subr.bf16.mxu0 0
    %2094 = vmatpush1.bf16.msra.mxu0 %v1588
    %2095 = vmatprep.subr.bf16.mxu0 0
    %2096 = vmatpush1.bf16.msra.mxu0 %v1589
    %2097 = vmatprep.subr.bf16.mxu0 0
    %2098 = vmatpush1.bf16.msra.mxu0 %v1590
    %2099 = vmatprep.subr.bf16.mxu0 0
    %2100 = vmatpush1.bf16.msra.mxu0 %v1591
    %2101 = vmatprep.subr.bf16.mxu0 0
    %2102 = vmatpush1.bf16.msra.mxu0 %v1592
    %2103 = vmatprep.subr.bf16.mxu0 0
    %2104 = vmatpush1.bf16.msra.mxu0 %v1593
    %2105 = vmatprep.subr.bf16.mxu0 0
    %2106 = vmatpush1.bf16.msra.mxu0 %v1594
    %2107 = vmatprep.subr.bf16.mxu0 0
    %2108 = vmatpush1.bf16.msra.mxu0 %v1595
    %2109 = vmatprep.subr.bf16.mxu0 0
    %2110 = vmatpush1.bf16.msra.mxu0 %v1596
    %2111 = vmatprep.subr.bf16.mxu0 0
    %2112 = vmatpush1.bf16.msra.mxu0 %v1597
    %2113 = vmatprep.subr.bf16.mxu0 0
    %2114 = vmatpush1.bf16.msra.mxu0 %v1598
    %2115 = vmatprep.subr.bf16.mxu0 0
    %2116 = vmatpush1.bf16.msra.mxu0 %v1599
    %2117 = vmatprep.subr.bf16.mxu0 0
    %2118 = vmatpush1.bf16.msra.mxu0 %v1600
    %2119 = vmatprep.subr.bf16.mxu0 0
    %2120 = vmatpush1.bf16.msra.mxu0 %v1601
    %2121 = vmatprep.subr.bf16.mxu0 0
    %2122 = vmatpush1.bf16.msra.mxu0 %v1602
    %2123 = vmatprep.mubr.bf16.mxu0 %v335
    %2124 = vmatmul.mubr.bf16.gmra.mrb[0].mxu0 %v334
    %v2125 = vpop.f32.mrb[0].mxu0
    %v2126 = vadd.f32 %v2086, %v2125
    %v2127 = vpop.f32.mrb[0].mxu0
    %v2128 = vpop.f32.mrb[0].mxu0
    %v2129 = vpop.f32.mrb[0].mxu0
    %2130 = vdwg.mxu0
    %2131 = vmatprep.subr.bf16.mxu0 0
    %2132 = vmatpush1.bf16.msra.mxu0 %v1603
    %2133 = vmatprep.subr.bf16.mxu0 0
    %2134 = vmatpush1.bf16.msra.mxu0 %v1604
    %2135 = vmatprep.subr.bf16.mxu0 0
    %2136 = vmatpush1.bf16.msra.mxu0 %v1605
    %2137 = vmatprep.subr.bf16.mxu0 0
    %2138 = vmatpush1.bf16.msra.mxu0 %v1606
    %2139 = vmatprep.subr.bf16.mxu0 0
    %2140 = vmatpush1.bf16.msra.mxu0 %v1607
    %2141 = vmatprep.subr.bf16.mxu0 0
    %2142 = vmatpush1.bf16.msra.mxu0 %v1608
    %2143 = vmatprep.subr.bf16.mxu0 0
    %2144 = vmatpush1.bf16.msra.mxu0 %v1609
    %2145 = vmatprep.subr.bf16.mxu0 0
    %2146 = vmatpush1.bf16.msra.mxu0 %v1610
    %2147 = vmatprep.subr.bf16.mxu0 0
    %2148 = vmatpush1.bf16.msra.mxu0 %v1611
    %2149 = vmatprep.subr.bf16.mxu0 0
    %2150 = vmatpush1.bf16.msra.mxu0 %v1612
    %2151 = vmatprep.subr.bf16.mxu0 0
    %2152 = vmatpush1.bf16.msra.mxu0 %v1613
    %2153 = vmatprep.subr.bf16.mxu0 0
    %2154 = vmatpush1.bf16.msra.mxu0 %v1614
    %2155 = vmatprep.subr.bf16.mxu0 0
    %2156 = vmatpush1.bf16.msra.mxu0 %v1615
    %2157 = vmatprep.subr.bf16.mxu0 0
    %2158 = vmatpush1.bf16.msra.mxu0 %v1616
    %2159 = vmatprep.subr.bf16.mxu0 0
    %2160 = vmatpush1.bf16.msra.mxu0 %v1617
    %2161 = vmatprep.subr.bf16.mxu0 0
    %2162 = vmatpush1.bf16.msra.mxu0 %v1618
    %2163 = vmatprep.mubr.bf16.mxu0 %v337
    %2164 = vmatmul.mubr.bf16.gmra.mrb[0].mxu0 %v336
    %v2165 = vpop.f32.mrb[0].mxu0
    %v2166 = vadd.f32 %v2126, %v2165
    %v2167 = vpop.f32.mrb[0].mxu0
    %v2168 = vpop.f32.mrb[0].mxu0
    %v2169 = vpop.f32.mrb[0].mxu0
    %2170 = vdwg.mxu0
    %2171 = vmatprep.subr.bf16.mxu0 0
    %2172 = vmatpush1.bf16.msra.mxu0 %v1619
    %2173 = vmatprep.subr.bf16.mxu0 0
    %2174 = vmatpush1.bf16.msra.mxu0 %v1620
    %2175 = vmatprep.subr.bf16.mxu0 0
    %2176 = vmatpush1.bf16.msra.mxu0 %v1621
    %2177 = vmatprep.subr.bf16.mxu0 0
    %2178 = vmatpush1.bf16.msra.mxu0 %v1622
    %2179 = vmatprep.subr.bf16.mxu0 0
    %2180 = vmatpush1.bf16.msra.mxu0 %v1623
    %2181 = vmatprep.subr.bf16.mxu0 0
    %2182 = vmatpush1.bf16.msra.mxu0 %v1624
    %2183 = vmatprep.subr.bf16.mxu0 0
    %2184 = vmatpush1.bf16.msra.mxu0 %v1625
    %2185 = vmatprep.subr.bf16.mxu0 0
    %2186 = vmatpush1.bf16.msra.mxu0 %v1626
    %2187 = vmatprep.subr.bf16.mxu0 0
    %2188 = vmatpush1.bf16.msra.mxu0 %v1627
    %2189 = vmatprep.subr.bf16.mxu0 0
    %2190 = vmatpush1.bf16.msra.mxu0 %v1628
    %2191 = vmatprep.subr.bf16.mxu0 0
    %2192 = vmatpush1.bf16.msra.mxu0 %v1629
    %2193 = vmatprep.subr.bf16.mxu0 0
    %2194 = vmatpush1.bf16.msra.mxu0 %v1630
    %2195 = vmatprep.subr.bf16.mxu0 0
    %2196 = vmatpush1.bf16.msra.mxu0 %v1631
    %2197 = vmatprep.subr.bf16.mxu0 0
    %2198 = vmatpush1.bf16.msra.mxu0 %v1632
    %2199 = vmatprep.subr.bf16.mxu0 0
    %2200 = vmatpush1.bf16.msra.mxu0 %v1633
    %2201 = vmatprep.subr.bf16.mxu0 0
    %2202 = vmatpush1.bf16.msra.mxu0 %v1634
    %2203 = vmatprep.mubr.bf16.mxu0 %v339
    %2204 = vmatmul.mubr.bf16.gmra.mrb[0].mxu0 %v338
    %v2205 = vpop.f32.mrb[0].mxu0
    %v2206 = vadd.f32 %v2166, %v2205
    %v2207 = vpop.f32.mrb[0].mxu0
    %v2208 = vpop.f32.mrb[0].mxu0
    %v2209 = vpop.f32.mrb[0].mxu0
    %2210 = vdwg.mxu0
    %2211 = vmatprep.subr.bf16.mxu0 0
    %2212 = vmatpush1.bf16.msra.mxu0 %v1635
    %2213 = vmatprep.subr.bf16.mxu0 0
    %2214 = vmatpush1.bf16.msra.mxu0 %v1636
    %2215 = vmatprep.subr.bf16.mxu0 0
    %2216 = vmatpush1.bf16.msra.mxu0 %v1637
    %2217 = vmatprep.subr.bf16.mxu0 0
    %2218 = vmatpush1.bf16.msra.mxu0 %v1638
    %2219 = vmatprep.subr.bf16.mxu0 0
    %2220 = vmatpush1.bf16.msra.mxu0 %v1639
    %2221 = vmatprep.subr.bf16.mxu0 0
    %2222 = vmatpush1.bf16.msra.mxu0 %v1640
    %2223 = vmatprep.subr.bf16.mxu0 0
    %2224 = vmatpush1.bf16.msra.mxu0 %v1641
    %2225 = vmatprep.subr.bf16.mxu0 0
    %2226 = vmatpush1.bf16.msra.mxu0 %v1642
    %2227 = vmatprep.subr.bf16.mxu0 0
    %2228 = vmatpush1.bf16.msra.mxu0 %v1643
    %2229 = vmatprep.subr.bf16.mxu0 0
    %2230 = vmatpush1.bf16.msra.mxu0 %v1644
    %2231 = vmatprep.subr.bf16.mxu0 0
    %2232 = vmatpush1.bf16.msra.mxu0 %v1645
    %2233 = vmatprep.subr.bf16.mxu0 0
    %2234 = vmatpush1.bf16.msra.mxu0 %v1646
    %2235 = vmatprep.subr.bf16.mxu0 0
    %2236 = vmatpush1.bf16.msra.mxu0 %v1647
    %2237 = vmatprep.subr.bf16.mxu0 0
    %2238 = vmatpush1.bf16.msra.mxu0 %v1648
    %2239 = vmatprep.subr.bf16.mxu0 0
    %2240 = vmatpush1.bf16.msra.mxu0 %v1649
    %2241 = vmatprep.subr.bf16.mxu0 0
    %2242 = vmatpush1.bf16.msra.mxu0 %v1650
    %2243 = vmatprep.mubr.bf16.mxu0 %v341
    %2244 = vmatmul.mubr.bf16.gmra.mrb[0].mxu0 %v340
    %v2245 = vpop.f32.mrb[0].mxu0
    %v2246 = vadd.f32 %v2206, %v2245
    %v2247 = vpop.f32.mrb[0].mxu0
    %v2248 = vpop.f32.mrb[0].mxu0
    %v2249 = vpop.f32.mrb[0].mxu0
    %2250 = vdwg.mxu0
    %2251 = vmatprep.subr.bf16.mxu0 0
    %2252 = vmatpush1.bf16.msra.mxu0 %v1651
    %2253 = vmatprep.subr.bf16.mxu0 0
    %2254 = vmatpush1.bf16.msra.mxu0 %v1652
    %2255 = vmatprep.subr.bf16.mxu0 0
    %2256 = vmatpush1.bf16.msra.mxu0 %v1653
    %2257 = vmatprep.subr.bf16.mxu0 0
    %2258 = vmatpush1.bf16.msra.mxu0 %v1654
    %2259 = vmatprep.subr.bf16.mxu0 0
    %2260 = vmatpush1.bf16.msra.mxu0 %v1655
    %2261 = vmatprep.subr.bf16.mxu0 0
    %2262 = vmatpush1.bf16.msra.mxu0 %v1656
    %2263 = vmatprep.subr.bf16.mxu0 0
    %2264 = vmatpush1.bf16.msra.mxu0 %v1657
    %2265 = vmatprep.subr.bf16.mxu0 0
    %2266 = vmatpush1.bf16.msra.mxu0 %v1658
    %2267 = vmatprep.subr.bf16.mxu0 0
    %2268 = vmatpush1.bf16.msra.mxu0 %v1659
    %2269 = vmatprep.subr.bf16.mxu0 0
    %2270 = vmatpush1.bf16.msra.mxu0 %v1660
    %2271 = vmatprep.subr.bf16.mxu0 0
    %2272 = vmatpush1.bf16.msra.mxu0 %v1661
    %2273 = vmatprep.subr.bf16.mxu0 0
    %2274 = vmatpush1.bf16.msra.mxu0 %v1662
    %2275 = vmatprep.subr.bf16.mxu0 0
    %2276 = vmatpush1.bf16.msra.mxu0 %v1663
    %2277 = vmatprep.subr.bf16.mxu0 0
    %2278 = vmatpush1.bf16.msra.mxu0 %v1664
    %2279 = vmatprep.subr.bf16.mxu0 0
    %2280 = vmatpush1.bf16.msra.mxu0 %v1665
    %2281 = vmatprep.subr.bf16.mxu0 0
    %2282 = vmatpush1.bf16.msra.mxu0 %v1666
    %2283 = vmatprep.mubr.bf16.mxu0 %v343
    %2284 = vmatmul.mubr.bf16.gmra.mrb[0].mxu0 %v342
    %v2285 = vpop.f32.mrb[0].mxu0
    %v2286 = vadd.f32 %v2246, %v2285
    %v2287 = vpop.f32.mrb[0].mxu0
    %v2288 = vpop.f32.mrb[0].mxu0
    %v2289 = vpop.f32.mrb[0].mxu0
    %2290 = vdwg.mxu0
    %2291 = vmatprep.subr.bf16.mxu0 0
    %2292 = vmatpush1.bf16.msra.mxu0 %v1667
    %2293 = vmatprep.subr.bf16.mxu0 0
    %2294 = vmatpush1.bf16.msra.mxu0 %v1668
    %2295 = vmatprep.subr.bf16.mxu0 0
    %2296 = vmatpush1.bf16.msra.mxu0 %v1669
    %2297 = vmatprep.subr.bf16.mxu0 0
    %2298 = vmatpush1.bf16.msra.mxu0 %v1670
    %2299 = vmatprep.subr.bf16.mxu0 0
    %2300 = vmatpush1.bf16.msra.mxu0 %v1671
    %2301 = vmatprep.subr.bf16.mxu0 0
    %2302 = vmatpush1.bf16.msra.mxu0 %v1672
    %2303 = vmatprep.subr.bf16.mxu0 0
    %2304 = vmatpush1.bf16.msra.mxu0 %v1673
    %2305 = vmatprep.subr.bf16.mxu0 0
    %2306 = vmatpush1.bf16.msra.mxu0 %v1674
    %2307 = vmatprep.subr.bf16.mxu0 0
    %2308 = vmatpush1.bf16.msra.mxu0 %v1675
    %2309 = vmatprep.subr.bf16.mxu0 0
    %2310 = vmatpush1.bf16.msra.mxu0 %v1676
    %2311 = vmatprep.subr.bf16.mxu0 0
    %2312 = vmatpush1.bf16.msra.mxu0 %v1677
    %2313 = vmatprep.subr.bf16.mxu0 0
    %2314 = vmatpush1.bf16.msra.mxu0 %v1678
    %2315 = vmatprep.subr.bf16.mxu0 0
    %2316 = vmatpush1.bf16.msra.mxu0 %v1679
    %2317 = vmatprep.subr.bf16.mxu0 0
    %2318 = vmatpush1.bf16.msra.mxu0 %v1680
    %2319 = vmatprep.subr.bf16.mxu0 0
    %2320 = vmatpush1.bf16.msra.mxu0 %v1681
    %2321 = vmatprep.subr.bf16.mxu0 0
    %2322 = vmatpush1.bf16.msra.mxu0 %v1682
    %2323 = vmatprep.mubr.bf16.mxu0 %v345
    %2324 = vmatmul.mubr.bf16.gmra.mrb[0].mxu0 %v344
    %v2325 = vpop.f32.mrb[0].mxu0
    %v2326 = vadd.f32 %v2286, %v2325
    %v2327 = vpop.f32.mrb[0].mxu0
    %v2328 = vpop.f32.mrb[0].mxu0
    %v2329 = vpop.f32.mrb[0].mxu0
    %2330 = vdwg.mxu0
    %2331 = vmatprep.subr.bf16.mxu0 0
    %2332 = vmatpush1.bf16.msra.mxu0 %v1683
    %2333 = vmatprep.subr.bf16.mxu0 0
    %2334 = vmatpush1.bf16.msra.mxu0 %v1684
    %2335 = vmatprep.subr.bf16.mxu0 0
    %2336 = vmatpush1.bf16.msra.mxu0 %v1685
    %2337 = vmatprep.subr.bf16.mxu0 0
    %2338 = vmatpush1.bf16.msra.mxu0 %v1686
    %2339 = vmatprep.subr.bf16.mxu0 0
    %2340 = vmatpush1.bf16.msra.mxu0 %v1687
    %2341 = vmatprep.subr.bf16.mxu0 0
    %2342 = vmatpush1.bf16.msra.mxu0 %v1688
    %2343 = vmatprep.subr.bf16.mxu0 0
    %2344 = vmatpush1.bf16.msra.mxu0 %v1689
    %2345 = vmatprep.subr.bf16.mxu0 0
    %2346 = vmatpush1.bf16.msra.mxu0 %v1690
    %2347 = vmatprep.subr.bf16.mxu0 0
    %2348 = vmatpush1.bf16.msra.mxu0 %v1691
    %2349 = vmatprep.subr.bf16.mxu0 0
    %2350 = vmatpush1.bf16.msra.mxu0 %v1692
    %2351 = vmatprep.subr.bf16.mxu0 0
    %2352 = vmatpush1.bf16.msra.mxu0 %v1693
    %2353 = vmatprep.subr.bf16.mxu0 0
    %2354 = vmatpush1.bf16.msra.mxu0 %v1694
    %2355 = vmatprep.subr.bf16.mxu0 0
    %2356 = vmatpush1.bf16.msra.mxu0 %v1695
    %2357 = vmatprep.subr.bf16.mxu0 0
    %2358 = vmatpush1.bf16.msra.mxu0 %v1696
    %2359 = vmatprep.subr.bf16.mxu0 0
    %2360 = vmatpush1.bf16.msra.mxu0 %v1697
    %2361 = vmatprep.subr.bf16.mxu0 0
    %2362 = vmatpush1.bf16.msra.mxu0 %v1698
    %2363 = vmatprep.mubr.bf16.mxu0 %v347
    %2364 = vmatmul.mubr.bf16.gmra.mrb[0].mxu0 %v346
    %v2365 = vpop.f32.mrb[0].mxu0
    %v2366 = vadd.f32 %v2326, %v2365
    %v2367 = vpop.f32.mrb[0].mxu0
    %v2368 = vpop.f32.mrb[0].mxu0
    %v2369 = vpop.f32.mrb[0].mxu0
    %2370 = vdwg.mxu0
    %v2371 = vmax.f32 %v2366, 0.0
    %v2372 = vpack.c.bf16 %v2371, %v2371
    %v2373 = vld [vmem:[%s3] sm:$0xf]
    %v2374 = vld [vmem:[%s3 + $0x4] sm:$0xf]
    %v2375 = vld [vmem:[%s3 + $0x8] sm:$0xf]
    %v2376 = vld [vmem:[%s3 + $0xc] sm:$0xf]
    %v2377 = vld [vmem:[%s3 + $0x10] sm:$0xf]
    %v2378 = vld [vmem:[%s3 + $0x14] sm:$0xf]
    %v2379 = vld [vmem:[%s3 + $0x18] sm:$0xf]
    %v2380 = vld [vmem:[%s3 + $0x1c] sm:$0xf]
    %v2381 = vld [vmem:[%s3 + $0x20] sm:$0xf]
    %v2382 = vld [vmem:[%s3 + $0x24] sm:$0xf]
    %v2383 = vld [vmem:[%s3 + $0x28] sm:$0xf]
    %v2384 = vld [vmem:[%s3 + $0x2c] sm:$0xf]
    %v2385 = vld [vmem:[%s3 + $0x30] sm:$0xf]
    %v2386 = vld [vmem:[%s3 + $0x34] sm:$0xf]
    %v2387 = vld [vmem:[%s3 + $0x38] sm:$0xf]
    %v2388 = vld [vmem:[%s3 + $0x3c] sm:$0xf]
    %v2389 = vld [vmem:[%s4] sm:$0x1]
    %v2391 = vlaneseq
    %v2392 = vshrl.u32 %v2391, 7
    %v2393 = vsub.s32 0, %v2392
    %v2394 = vrot.slane %v2389, %v2393
    %v2412 = vunpack.c.l.b16 %v2373
    %v2413 = vunpack.c.l.b16 %v2374
    %v2414 = vunpack.c.l.b16 %v2375
    %v2415 = vunpack.c.l.b16 %v2376
    %v2416 = vunpack.c.l.b16 %v2377
    %v2417 = vunpack.c.l.b16 %v2378
    %v2418 = vunpack.c.l.b16 %v2379
    %v2419 = vunpack.c.l.b16 %v2380
    %v2420 = vunpack.c.l.b16 %v2381
    %v2421 = vunpack.c.l.b16 %v2382
    %v2422 = vunpack.c.l.b16 %v2383
    %v2423 = vunpack.c.l.b16 %v2384
    %v2424 = vunpack.c.l.b16 %v2385
    %v2425 = vunpack.c.l.b16 %v2386
    %v2426 = vunpack.c.l.b16 %v2387
    %v2427 = vunpack.c.l.b16 %v2388
    %v2428 = vpack.c.b16 %v2413, %v2412
    %v2429 = vpack.c.b16 %v2415, %v2414
    %v2430 = vpack.c.b16 %v2417, %v2416
    %v2431 = vpack.c.b16 %v2419, %v2418
    %v2432 = vpack.c.b16 %v2421, %v2420
    %v2433 = vpack.c.b16 %v2423, %v2422
    %v2434 = vpack.c.b16 %v2425, %v2424
    %v2435 = vpack.c.b16 %v2427, %v2426
    %2444 = vmatprep.subr.bf16.mxu0 0
    %2445 = vmatpush1.bf16.msra.mxu0 %v2428
    %2446 = vmatprep.subr.bf16.mxu0 0
    %2447 = vmatpush1.bf16.msra.mxu0 %v2429
    %2448 = vmatprep.subr.bf16.mxu0 0
    %2449 = vmatpush1.bf16.msra.mxu0 %v2430
    %2450 = vmatprep.subr.bf16.mxu0 0
    %2451 = vmatpush1.bf16.msra.mxu0 %v2431
    %2452 = vmatprep.subr.bf16.mxu0 0
    %2453 = vmatpush1.bf16.msra.mxu0 %v2432
    %2454 = vmatprep.subr.bf16.mxu0 0
    %2455 = vmatpush1.bf16.msra.mxu0 %v2433
    %2456 = vmatprep.subr.bf16.mxu0 0
    %2457 = vmatpush1.bf16.msra.mxu0 %v2434
    %2458 = vmatprep.subr.bf16.mxu0 0
    %2459 = vmatpush1.bf16.msra.mxu0 %v2435
    %2460 = vmatprep.subr.bf16.mxu0 0
    %2461 = vmatpush1.bf16.msra.mxu0 0
    %2462 = vmatprep.subr.bf16.mxu0 0
    %2463 = vmatpush1.bf16.msra.mxu0 0
    %2464 = vmatprep.subr.bf16.mxu0 0
    %2465 = vmatpush1.bf16.msra.mxu0 0
    %2466 = vmatprep.subr.bf16.mxu0 0
    %2467 = vmatpush1.bf16.msra.mxu0 0
    %2468 = vmatprep.subr.bf16.mxu0 0
    %2469 = vmatpush1.bf16.msra.mxu0 0
    %2470 = vmatprep.subr.bf16.mxu0 0
    %2471 = vmatpush1.bf16.msra.mxu0 0
    %2472 = vmatprep.subr.bf16.mxu0 0
    %2473 = vmatpush1.bf16.msra.mxu0 0
    %2474 = vmatprep.subr.bf16.mxu0 0
    %2475 = vmatpush1.bf16.msra.mxu0 0
    %2476 = vmatprep.mubr.bf16.mxu0 0
    %2477 = vmatmul.mubr.bf16.gmra.mrb[0].mxu0 %v2372
    %v2478 = vpop.f32.mrb[0].mxu0
    %v2479 = vadd.f32 %v2394, %v2478
    %v2480 = vpop.f32.mrb[0].mxu0
    %v2481 = vpop.f32.mrb[0].mxu0
    %v2482 = vpop.f32.mrb[0].mxu0
    %2483 = vdwg.mxu0
    %2484 = vmax.xlane.f32.xlu0 %v2479
    %v2485 = vpop.xlane.xlu0 %2484
    %v2486 = vsub.f32 %v2479, %v2485
    %v2487 = vmul.f32 %v2486, 1.442695
    %v2488 = vpow.pop %v2487
    %2489 = vadd.xlane.f32.xlu0 %v2488
    %v2490 = vpop.xlane.xlu0 %2489
    %v2491 = vrcp.pop %v2490
    %v2492 = vmul.f32 %v2488, %v2491
    %2493 = vst [vmem:[#allocation5] sm:$0xff] %v2492
    // Predicated region
    $region26: #{fl_forward.1} parent=1 // pred_check
      _
    $region27: #{fl_forward.1} parent=1 // pred_check_branch
      %2495 = sbr.rel (0) target = $region29
    $region28: #{fl_forward.1} parent=1 // pred_region
      %s2497 = ssub.s32 128, 32
      %2498 = vsyncadd [#allocation4], %s2497
      %s2499 = sshll.u32 [#allocation5], 4
      %s2500 = int_to_ptr.vmem [resolvable:$true] %s2499
      %2505 = dma.vmem_to_hbm [thread:$0]  %s2500, 32, %s5, [#allocation4], 32, 32, 2
    $region29: #{fl_forward.1} parent=1 // pred_fallthru
      _
    // Predicated region
    $region30: #{fl_forward.1} parent=1 // pred_check
      _
    $region31: #{fl_forward.1} parent=1 // pred_check_branch
      %2507 = sbr.rel (0) target = $region33
    $region32: #{fl_forward.1} parent=1 // pred_region
      %2508 = dma.done [#allocation4], 128
    $region33: #{fl_forward.1} parent=1 // pred_fallthru
      _
    %2509 = vsyncpa [#allocation3], 1
    %2510 = vsyncpa [#allocation4], 1

</llo_original>
